<compile_context>
chip_gen: v6e
topology: v6e:2x2x1
jax: 0.10.0
libtpu: 0.0.40
codegen_flags: <defaults>
</compile_context>

<pallas_src>
import functools

import numpy as np
import jax
import jax.numpy as jnp
from jax import lax
from jax.experimental import pallas as pl
from jax.experimental.pallas import tpu as pltpu


# ------------------------------ Configuration ------------------------------ #

INPUT_SIZE = 8
SEQ_LEN = 8
LSTM_HIDDEN_SIZES = [16, 16]
FC_SIZES = [32, 4]          # module uses fc_sizes[:-1] for hidden FCs; final Linear -> 1
DROPOUT_RATE = 0.0          # identity (p=0 / inference)
BATCH = 2


# ------------------------------ Pallas kernel ------------------------------- #

def _fused_forward_kernel(T, BP, H, cd,
                          x_ref, mask_ref, w1p_ref, b_ref, wrec_ref,
                          wfc1_ref, bfc1_ref, wfc2_ref, bfc2_ref, o_ref):
    """Entire LSTMNetworkWithMask forward in one kernel.

    Fused gate column blocks (width H each): i1,i2,f1,f2,o1,o2,g1,g2 (8H = 128 lanes).
    Fused state layout: h12 / c12 = [layer1 | layer2]  ([BP, 2H]).

    x_ref   : [(T+1)*BP, D]  time-major input, batch padded to BP=8 rows, plus one
              trailing all-zero "warm-down" timestep for the skewed recurrence
    mask_ref: [1, D]     feature mask
    w1p_ref : [D, 8H]    layer-1 input->gates projection in fused columns
    b_ref   : [1, 8H]    combined (b_ih+b_hh) biases of BOTH layers
    wrec_ref: [2H, 8H]   fused recurrence matrix [[whh1, wih2],[0, whh2]] (transposed blocks)
    wfc*    : FC head weights [in, out] / biases [1, out]
    o_ref   : [BP, 1]
    """
    H2, H4, H6 = 2 * H, 4 * H, 6 * H

    # Feature mask + hoisted input->gates projection for ALL T+1 fused steps as a
    # single matmul, with the biases of both layers folded in.
    xm = (x_ref[...] * mask_ref[...]).astype(cd)                         # [(T+1)*BP, D]
    gx = jnp.dot(xm, w1p_ref[...], preferred_element_type=jnp.float32) + b_ref[...]

    wrec = wrec_ref[...]
    h12 = jnp.zeros((BP, H2), jnp.float32)
    c12 = jnp.zeros((BP, H2), jnp.float32)
    # Column mask selecting the layer-1 half of the fused state (used only at s=0).
    l1_half = (lax.broadcasted_iota(jnp.int32, (1, H2), 1) < H).astype(jnp.float32)

    # Skewed fused recurrence: at fused step s, layer 1 consumes x[s] while layer 2
    # consumes h1[s-1]; both read the pre-update state through ONE [BP,2H]x[2H,8H]
    # matmul.  T+1 steps total, statically unrolled (T=8).
    # TODO(synk): for T >~ 32 switch to lax.fori_loop(..., unroll=4-8) with the
    # weights hoisted, to keep vreg live ranges bounded.
    for s in range(T + 1):
        # gx slice is 8-sublane aligned (BP == 8): no interior-row shuffle.
        gates = gx[s * BP:(s + 1) * BP, :] + jnp.dot(
            h12.astype(cd), wrec, preferred_element_type=jnp.float32)   # [BP, 8H]
        sig = jax.nn.sigmoid(gates[:, :H6])      # i1,i2,f1,f2,o1,o2 in one EUP pass
        g12 = jnp.tanh(gates[:, H6:])            # g1,g2 in one EUP pass
        c_new = sig[:, H2:H4] * c12 + sig[:, :H2] * g12     # both layers at once
        h_new = sig[:, H4:H6] * jnp.tanh(c_new)
        if s == 0:
            # Layer 2 has not received any valid input yet: keep its half at zero.
            c_new = c_new * l1_half
            h_new = h_new * l1_half
        c12, h12 = c_new, h_new
        # (At s == T the layer-1 half processes the zero pad step; that garbage is
        #  never read again, so no masking is needed.)

    h2_last = h12[:, H:H2]                       # layer-2 h at timestep T-1, [BP, H]

    # FC head: Linear + ReLU (+ Dropout p=0.0 == identity) + Linear -> [BP, 1]
    z = jnp.dot(h2_last.astype(cd), wfc1_ref[...],
                preferred_element_type=jnp.float32) + bfc1_ref[...]
    z = jnp.maximum(z, 0.0)
    out = jnp.dot(z.astype(cd), wfc2_ref[...],
                  preferred_element_type=jnp.float32) + bfc2_ref[...]
    # 1-lane store is negligible at this width; pad lanes if the head ever widens.
    o_ref[...] = out.astype(o_ref.dtype)


_VMEM = pl.BlockSpec(memory_space=pltpu.MemorySpace.VMEM)


@functools.partial(jax.jit, static_argnames=("compute_dtype",))
def forward(x, mask, packed, *, compute_dtype=jnp.float32):
    """x: [B, T, D], mask: [D]. Returns [B, 1]."""
    w1p, bias, wrec, wfc1, bfc1, wfc2, bfc2 = packed
    B, T, D = x.shape
    H = wrec.shape[0] // 2                    # derived from weights, not a global
    BP = max(8, -(-B // 8) * 8)               # pad batch to full 8-row sublane tiles

    # Time-major, batch padded to BP rows, plus one zero "warm-down" timestep so the
    # skewed two-layer recurrence runs T+1 uniform steps.  Every per-step slice in
    # the kernel is then tile-aligned and no y1 scratch / writeback is needed.
    x_tm = jnp.transpose(x, (1, 0, 2))                          # [T, B, D]
    x_tm = jnp.pad(x_tm, ((0, 1), (0, BP - B), (0, 0)))         # [T+1, BP, D]
    x_flat = x_tm.reshape((T + 1) * BP, D)

    cd = compute_dtype
    w1p_c, wrec_c, wfc1_c, wfc2_c = (w.astype(cd) for w in (w1p, wrec, wfc1, wfc2))

    # Gridless single-core call: footprint is a few tens of KiB, everything stays
    # in VMEM/vregs and only [BP, 1] goes back to HBM.
    # TODO(synk): if batch grows to >= 16, add a grid over batch tiles with
    # dimension_semantics=("parallel",) so both v7x TensorCores are used.
    out = pl.pallas_call(
        functools.partial(_fused_forward_kernel, T, BP, H, cd),
        out_shape=jax.ShapeDtypeStruct((BP, 1), jnp.float32),
        in_specs=[_VMEM] * 9,
        out_specs=_VMEM,
    )(x_flat, mask.reshape(1, D), w1p_c, bias, wrec_c, wfc1_c, bfc1, wfc2_c, bfc2)
    return out[:B]


# --------------------------- Parameter construction ------------------------- #

def init_params(key):
    """PyTorch-layout params: LSTM [4H,D]/[4H,H]/[4H] (gate rows i,f,g,o), FC [out,in]/[out]."""
    params = {"lstm": [], "fc": []}
    prev = INPUT_SIZE
    for H in LSTM_HIDDEN_SIZES:
        k = 1.0 / np.sqrt(H)
        key, k1, k2, k3, k4 = jax.random.split(key, 5)
        w_ih = jax.random.uniform(k1, (4 * H, prev), jnp.float32, -k, k)
        w_hh = jax.random.uniform(k2, (4 * H, H), jnp.float32, -k, k)
        b_ih = jax.random.uniform(k3, (4 * H,), jnp.float32, -k, k)
        b_hh = jax.random.uniform(k4, (4 * H,), jnp.float32, -k, k)
        params["lstm"].append((w_ih, w_hh, b_ih, b_hh))
        prev = H
    fc_dims = [LSTM_HIDDEN_SIZES[-1]] + FC_SIZES[:-1] + [1]   # final Linear -> 1 (module spec)
    for d_in, d_out in zip(fc_dims[:-1], fc_dims[1:]):
        k = 1.0 / np.sqrt(d_in)
        key, k1, k2 = jax.random.split(key, 3)
        w = jax.random.uniform(k1, (d_out, d_in), jnp.float32, -k, k)
        b = jax.random.uniform(k2, (d_out,), jnp.float32, -k, k)
        params["fc"].append((w, b))
    return params


def pack_params(params):
    """Pack PyTorch params into the fused-kernel layout.

    Fused gate column blocks (width H): i1,i2,f1,f2,o1,o2,g1,g2 — one sigmoid covers
    lanes [0,6H), one tanh covers [6H,8H), and the cell update is shared by both layers.
    """
    assert len(params["lstm"]) == 2, "fused kernel is specialised to 2 stacked LSTM layers"
    (w_ih1, w_hh1, b_ih1, b_hh1), (w_ih2, w_hh2, b_ih2, b_hh2) = params["lstm"]
    H = w_hh1.shape[1]
    assert w_hh2.shape[1] == H and w_ih2.shape[1] == H, "layer fusion requires equal LSTM widths"

    def blocks(w):   # split PyTorch row-block order (i, f, g, o)
        return {"i": w[0:H], "f": w[H:2 * H], "g": w[2 * H:3 * H], "o": w[3 * H:4 * H]}

    g1_ih, g1_hh = blocks(w_ih1), blocks(w_hh1)
    g2_ih, g2_hh = blocks(w_ih2), blocks(w_hh2)
    b1 = blocks((b_ih1 + b_hh1)[:, None])
    b2 = blocks((b_ih2 + b_hh2)[:, None])

    order = ("i", "f", "o", "g")              # -> column blocks i1,i2,f1,f2,o1,o2,g1,g2
    z_d = jnp.zeros_like(g1_ih["i"])          # [H, D]
    z_h = jnp.zeros_like(g1_hh["i"])          # [H, H]

    # Layer-1 input projection in fused columns (layer-2 columns are zero; their
    # per-step input contribution is just the bias b2, folded into `bias`).
    w1p = jnp.concatenate([m for g in order for m in (g1_ih[g], z_d)], axis=0).T    # [D, 8H]
    bias = jnp.concatenate([m for g in order for m in (b1[g], b2[g])], axis=0).T    # [1, 8H]
    # Fused recurrence: [h1 | h2] @ wrec == [h1@whh1^T | h1@wih2^T + h2@whh2^T].
    top = jnp.concatenate([m for g in order for m in (g1_hh[g], g2_ih[g])], axis=0).T  # [H, 8H]
    bot = jnp.concatenate([m for g in order for m in (z_h, g2_hh[g])], axis=0).T       # [H, 8H]
    wrec = jnp.concatenate([top, bot], axis=0)                                         # [2H, 8H]

    (wfc1, bfc1), (wfc2, bfc2) = params["fc"]
    return (w1p, bias, wrec, wfc1.T, bfc1[None, :], wfc2.T, bfc2[None, :])


# ----------------------------- Pure-JAX reference --------------------------- #

def _lstm_ref(x_btd, w_ih, w_hh, b_ih, b_hh):
    H = w_hh.shape[1]
    B = x_btd.shape[0]

    def step(carry, x_t):
        h, c = carry
        gates = x_t @ w_ih.T + h @ w_hh.T + b_ih + b_hh
        i_g = jax.nn.sigmoid(gates[:, :H])
        f_g = jax.nn.sigmoid(gates[:, H:2 * H])
        g_g = jnp.tanh(gates[:, 2 * H:3 * H])
        o_g = jax.nn.sigmoid(gates[:, 3 * H:])
        c = f_g * c + i_g * g_g
        h = o_g * jnp.tanh(c)
        return (h, c), h

    init = (jnp.zeros((B, H), jnp.float32), jnp.zeros((B, H), jnp.float32))
    _, ys = lax.scan(step, init, jnp.transpose(x_btd, (1, 0, 2)))
    return jnp.transpose(ys, (1, 0, 2))


def forward_ref(x, mask, params):
    h = x * mask[None, None, :]
    for (w_ih, w_hh, b_ih, b_hh) in params["lstm"]:
        h = _lstm_ref(h, w_ih, w_hh, b_ih, b_hh)
    out = h[:, -1, :]
    n_fc = len(params["fc"])
    for idx, (w, b) in enumerate(params["fc"]):
        out = out @ w.T + b
        if idx < n_fc - 1:
            out = jnp.maximum(out, 0.0)   # ReLU; Dropout(0.0) is identity
    return out


# ----------------------------------- Main ----------------------------------- #

if __name__ == "__main__":
    key = jax.random.PRNGKey(0)
    key, pk, xk = jax.random.split(key, 3)
    params = init_params(pk)
    packed = pack_params(params)
    x = jax.random.normal(xk, (BATCH, SEQ_LEN, INPUT_SIZE), jnp.float32)

    # Default mask (all features enabled) and a mask with features {1, 5} disabled
    # to exercise FeatureMaskLayer / set_mask semantics.
    mask_on = jnp.ones((INPUT_SIZE,), jnp.float32)
    mask_off = mask_on.at[jnp.array([1, 5])].set(0.0)

    for mask in (mask_on, mask_off):
        ref = jax.block_until_ready(forward_ref(x, mask, params))

        # Exact-semantics f32 path (v5e-friendly; also the correctness baseline).
        out_f32 = jax.block_until_ready(forward(x, mask, packed, compute_dtype=jnp.float32))
        np.testing.assert_allclose(np.asarray(out_f32), np.asarray(ref), rtol=1e-4, atol=1e-4)
        assert out_f32.shape == (BATCH, 1)

        # bf16 matmul operands / f32 accumulation (MXU-native on v6e/v7x).
        out_bf16 = jax.block_until_ready(forward(x, mask, packed, compute_dtype=jnp.bfloat16))
        np.testing.assert_allclose(np.asarray(out_bf16), np.asarray(ref), rtol=5e-2, atol=5e-2)

    print("KERNEL_OK")
</pallas_src>

<mosaic_0001>
module attributes {stable_mosaic.version = 11 : i64} {
  func.func @_fused_forward_kernel(%arg0: memref<72x8xf32, #tpu.memory_space<vmem>>, %arg1: memref<1x8xf32, #tpu.memory_space<vmem>>, %arg2: memref<8x128xf32, #tpu.memory_space<vmem>>, %arg3: memref<1x128xf32, #tpu.memory_space<vmem>>, %arg4: memref<32x128xf32, #tpu.memory_space<vmem>>, %arg5: memref<16x32xf32, #tpu.memory_space<vmem>>, %arg6: memref<1x32xf32, #tpu.memory_space<vmem>>, %arg7: memref<32x1xf32, #tpu.memory_space<vmem>>, %arg8: memref<1x1xf32, #tpu.memory_space<vmem>>, %arg9: memref<8x1xf32, #tpu.memory_space<vmem>>) attributes {dimension_semantics = [], scalar_prefetch = 0 : i64, scratch_operands = 0 : i64, tpu.core_type = #tpu.core_type<tc>} {
    %c0 = arith.constant 0 : index
    %c0_0 = arith.constant 0 : index
    %0 = vector.load %arg0[%c0, %c0_0] : memref<72x8xf32, #tpu.memory_space<vmem>>, vector<72x8xf32>
    %c0_1 = arith.constant 0 : index
    %c0_2 = arith.constant 0 : index
    %1 = vector.load %arg1[%c0_1, %c0_2] : memref<1x8xf32, #tpu.memory_space<vmem>>, vector<1x8xf32>
    %2 = vector.broadcast %1 : vector<1x8xf32> to vector<72x8xf32>
    %3 = arith.mulf %0, %2 : vector<72x8xf32>
    %c0_3 = arith.constant 0 : index
    %c0_4 = arith.constant 0 : index
    %4 = vector.load %arg2[%c0_3, %c0_4] : memref<8x128xf32, #tpu.memory_space<vmem>>, vector<8x128xf32>
    %cst = arith.constant dense<0.000000e+00> : vector<72x128xf32>
    %5 = tpu.matmul %3, %4, %cst {dimension_numbers = #tpu.dot_dimension_numbers<[1], [0], [0], [1], [0, 0, 1, 1], [], []>} : vector<72x8xf32>, vector<8x128xf32>, vector<72x128xf32> -> vector<72x128xf32>
    %c0_5 = arith.constant 0 : index
    %c0_6 = arith.constant 0 : index
    %6 = vector.load %arg3[%c0_5, %c0_6] : memref<1x128xf32, #tpu.memory_space<vmem>>, vector<1x128xf32>
    %7 = vector.broadcast %6 : vector<1x128xf32> to vector<72x128xf32>
    %8 = arith.addf %5, %7 : vector<72x128xf32>
    %c0_7 = arith.constant 0 : index
    %c0_8 = arith.constant 0 : index
    %9 = vector.load %arg4[%c0_7, %c0_8] : memref<32x128xf32, #tpu.memory_space<vmem>>, vector<32x128xf32>
    %cst_9 = arith.constant 0.000000e+00 : f32
    %10 = vector.broadcast %cst_9 : f32 to vector<8x32xf32>
    %cst_10 = arith.constant 0.000000e+00 : f32
    %11 = vector.broadcast %cst_10 : f32 to vector<8x32xf32>
    %12 = tpu.iota {dimensions = array<i32: 1>} : vector<1x32xi32>
    %c16_i32 = arith.constant 16 : i32
    %13 = vector.broadcast %c16_i32 : i32 to vector<1x32xi32>
    %14 = arith.cmpi slt, %12, %13 : vector<1x32xi32>
    %15 = arith.extui %14 : vector<1x32xi1> to vector<1x32xi32>
    %16 = arith.sitofp %15 : vector<1x32xi32> to vector<1x32xf32>
    %17 = vector.extract_strided_slice %8 {offsets = [0, 0], sizes = [8, 128], strides = [1, 1]} : vector<72x128xf32> to vector<8x128xf32>
    %cst_11 = arith.constant dense<0.000000e+00> : vector<8x128xf32>
    %18 = tpu.matmul %10, %9, %cst_11 {dimension_numbers = #tpu.dot_dimension_numbers<[1], [0], [0], [1], [0, 0, 1, 1], [], []>} : vector<8x32xf32>, vector<32x128xf32>, vector<8x128xf32> -> vector<8x128xf32>
    %19 = arith.addf %17, %18 : vector<8x128xf32>
    %20 = vector.extract_strided_slice %19 {offsets = [0, 0], sizes = [8, 96], strides = [1, 1]} : vector<8x128xf32> to vector<8x96xf32>
    %21 = arith.negf %20 : vector<8x96xf32>
    %22 = math.exp %21 : vector<8x96xf32>
    %cst_12 = arith.constant 1.000000e+00 : f32
    %23 = vector.broadcast %cst_12 : f32 to vector<8x96xf32>
    %24 = arith.addf %23, %22 : vector<8x96xf32>
    %25 = arith.divf %23, %24 : vector<8x96xf32>
    %26 = vector.extract_strided_slice %19 {offsets = [0, 96], sizes = [8, 32], strides = [1, 1]} : vector<8x128xf32> to vector<8x32xf32>
    %27 = math.tanh %26 : vector<8x32xf32>
    %28 = vector.extract_strided_slice %25 {offsets = [0, 32], sizes = [8, 32], strides = [1, 1]} : vector<8x96xf32> to vector<8x32xf32>
    %29 = arith.mulf %28, %11 : vector<8x32xf32>
    %30 = vector.extract_strided_slice %25 {offsets = [0, 0], sizes = [8, 32], strides = [1, 1]} : vector<8x96xf32> to vector<8x32xf32>
    %31 = arith.mulf %30, %27 : vector<8x32xf32>
    %32 = arith.addf %29, %31 : vector<8x32xf32>
    %33 = vector.extract_strided_slice %25 {offsets = [0, 64], sizes = [8, 32], strides = [1, 1]} : vector<8x96xf32> to vector<8x32xf32>
    %34 = math.tanh %32 : vector<8x32xf32>
    %35 = arith.mulf %33, %34 : vector<8x32xf32>
    %36 = vector.broadcast %16 : vector<1x32xf32> to vector<8x32xf32>
    %37 = arith.mulf %32, %36 : vector<8x32xf32>
    %38 = vector.broadcast %16 : vector<1x32xf32> to vector<8x32xf32>
    %39 = arith.mulf %35, %38 : vector<8x32xf32>
    %40 = vector.extract_strided_slice %8 {offsets = [8, 0], sizes = [8, 128], strides = [1, 1]} : vector<72x128xf32> to vector<8x128xf32>
    %cst_13 = arith.constant dense<0.000000e+00> : vector<8x128xf32>
    %41 = tpu.matmul %39, %9, %cst_13 {dimension_numbers = #tpu.dot_dimension_numbers<[1], [0], [0], [1], [0, 0, 1, 1], [], []>} : vector<8x32xf32>, vector<32x128xf32>, vector<8x128xf32> -> vector<8x128xf32>
    %42 = arith.addf %40, %41 : vector<8x128xf32>
    %43 = vector.extract_strided_slice %42 {offsets = [0, 0], sizes = [8, 96], strides = [1, 1]} : vector<8x128xf32> to vector<8x96xf32>
    %44 = arith.negf %43 : vector<8x96xf32>
    %45 = math.exp %44 : vector<8x96xf32>
    %cst_14 = arith.constant 1.000000e+00 : f32
    %46 = vector.broadcast %cst_14 : f32 to vector<8x96xf32>
    %47 = arith.addf %46, %45 : vector<8x96xf32>
    %48 = arith.divf %46, %47 : vector<8x96xf32>
    %49 = vector.extract_strided_slice %42 {offsets = [0, 96], sizes = [8, 32], strides = [1, 1]} : vector<8x128xf32> to vector<8x32xf32>
    %50 = math.tanh %49 : vector<8x32xf32>
    %51 = vector.extract_strided_slice %48 {offsets = [0, 32], sizes = [8, 32], strides = [1, 1]} : vector<8x96xf32> to vector<8x32xf32>
    %52 = arith.mulf %51, %37 : vector<8x32xf32>
    %53 = vector.extract_strided_slice %48 {offsets = [0, 0], sizes = [8, 32], strides = [1, 1]} : vector<8x96xf32> to vector<8x32xf32>
    %54 = arith.mulf %53, %50 : vector<8x32xf32>
    %55 = arith.addf %52, %54 : vector<8x32xf32>
    %56 = vector.extract_strided_slice %48 {offsets = [0, 64], sizes = [8, 32], strides = [1, 1]} : vector<8x96xf32> to vector<8x32xf32>
    %57 = math.tanh %55 : vector<8x32xf32>
    %58 = arith.mulf %56, %57 : vector<8x32xf32>
    %59 = vector.extract_strided_slice %8 {offsets = [16, 0], sizes = [8, 128], strides = [1, 1]} : vector<72x128xf32> to vector<8x128xf32>
    %cst_15 = arith.constant dense<0.000000e+00> : vector<8x128xf32>
    %60 = tpu.matmul %58, %9, %cst_15 {dimension_numbers = #tpu.dot_dimension_numbers<[1], [0], [0], [1], [0, 0, 1, 1], [], []>} : vector<8x32xf32>, vector<32x128xf32>, vector<8x128xf32> -> vector<8x128xf32>
    %61 = arith.addf %59, %60 : vector<8x128xf32>
    %62 = vector.extract_strided_slice %61 {offsets = [0, 0], sizes = [8, 96], strides = [1, 1]} : vector<8x128xf32> to vector<8x96xf32>
    %63 = arith.negf %62 : vector<8x96xf32>
    %64 = math.exp %63 : vector<8x96xf32>
    %cst_16 = arith.constant 1.000000e+00 : f32
    %65 = vector.broadcast %cst_16 : f32 to vector<8x96xf32>
    %66 = arith.addf %65, %64 : vector<8x96xf32>
    %67 = arith.divf %65, %66 : vector<8x96xf32>
    %68 = vector.extract_strided_slice %61 {offsets = [0, 96], sizes = [8, 32], strides = [1, 1]} : vector<8x128xf32> to vector<8x32xf32>
    %69 = math.tanh %68 : vector<8x32xf32>
    %70 = vector.extract_strided_slice %67 {offsets = [0, 32], sizes = [8, 32], strides = [1, 1]} : vector<8x96xf32> to vector<8x32xf32>
    %71 = arith.mulf %70, %55 : vector<8x32xf32>
    %72 = vector.extract_strided_slice %67 {offsets = [0, 0], sizes = [8, 32], strides = [1, 1]} : vector<8x96xf32> to vector<8x32xf32>
    %73 = arith.mulf %72, %69 : vector<8x32xf32>
    %74 = arith.addf %71, %73 : vector<8x32xf32>
    %75 = vector.extract_strided_slice %67 {offsets = [0, 64], sizes = [8, 32], strides = [1, 1]} : vector<8x96xf32> to vector<8x32xf32>
    %76 = math.tanh %74 : vector<8x32xf32>
    %77 = arith.mulf %75, %76 : vector<8x32xf32>
    %78 = vector.extract_strided_slice %8 {offsets = [24, 0], sizes = [8, 128], strides = [1, 1]} : vector<72x128xf32> to vector<8x128xf32>
    %cst_17 = arith.constant dense<0.000000e+00> : vector<8x128xf32>
    %79 = tpu.matmul %77, %9, %cst_17 {dimension_numbers = #tpu.dot_dimension_numbers<[1], [0], [0], [1], [0, 0, 1, 1], [], []>} : vector<8x32xf32>, vector<32x128xf32>, vector<8x128xf32> -> vector<8x128xf32>
    %80 = arith.addf %78, %79 : vector<8x128xf32>
    %81 = vector.extract_strided_slice %80 {offsets = [0, 0], sizes = [8, 96], strides = [1, 1]} : vector<8x128xf32> to vector<8x96xf32>
    %82 = arith.negf %81 : vector<8x96xf32>
    %83 = math.exp %82 : vector<8x96xf32>
    %cst_18 = arith.constant 1.000000e+00 : f32
    %84 = vector.broadcast %cst_18 : f32 to vector<8x96xf32>
    %85 = arith.addf %84, %83 : vector<8x96xf32>
    %86 = arith.divf %84, %85 : vector<8x96xf32>
    %87 = vector.extract_strided_slice %80 {offsets = [0, 96], sizes = [8, 32], strides = [1, 1]} : vector<8x128xf32> to vector<8x32xf32>
    %88 = math.tanh %87 : vector<8x32xf32>
    %89 = vector.extract_strided_slice %86 {offsets = [0, 32], sizes = [8, 32], strides = [1, 1]} : vector<8x96xf32> to vector<8x32xf32>
    %90 = arith.mulf %89, %74 : vector<8x32xf32>
    %91 = vector.extract_strided_slice %86 {offsets = [0, 0], sizes = [8, 32], strides = [1, 1]} : vector<8x96xf32> to vector<8x32xf32>
    %92 = arith.mulf %91, %88 : vector<8x32xf32>
    %93 = arith.addf %90, %92 : vector<8x32xf32>
    %94 = vector.extract_strided_slice %86 {offsets = [0, 64], sizes = [8, 32], strides = [1, 1]} : vector<8x96xf32> to vector<8x32xf32>
    %95 = math.tanh %93 : vector<8x32xf32>
    %96 = arith.mulf %94, %95 : vector<8x32xf32>
    %97 = vector.extract_strided_slice %8 {offsets = [32, 0], sizes = [8, 128], strides = [1, 1]} : vector<72x128xf32> to vector<8x128xf32>
    %cst_19 = arith.constant dense<0.000000e+00> : vector<8x128xf32>
    %98 = tpu.matmul %96, %9, %cst_19 {dimension_numbers = #tpu.dot_dimension_numbers<[1], [0], [0], [1], [0, 0, 1, 1], [], []>} : vector<8x32xf32>, vector<32x128xf32>, vector<8x128xf32> -> vector<8x128xf32>
    %99 = arith.addf %97, %98 : vector<8x128xf32>
    %100 = vector.extract_strided_slice %99 {offsets = [0, 0], sizes = [8, 96], strides = [1, 1]} : vector<8x128xf32> to vector<8x96xf32>
    %101 = arith.negf %100 : vector<8x96xf32>
    %102 = math.exp %101 : vector<8x96xf32>
    %cst_20 = arith.constant 1.000000e+00 : f32
    %103 = vector.broadcast %cst_20 : f32 to vector<8x96xf32>
    %104 = arith.addf %103, %102 : vector<8x96xf32>
    %105 = arith.divf %103, %104 : vector<8x96xf32>
    %106 = vector.extract_strided_slice %99 {offsets = [0, 96], sizes = [8, 32], strides = [1, 1]} : vector<8x128xf32> to vector<8x32xf32>
    %107 = math.tanh %106 : vector<8x32xf32>
    %108 = vector.extract_strided_slice %105 {offsets = [0, 32], sizes = [8, 32], strides = [1, 1]} : vector<8x96xf32> to vector<8x32xf32>
    %109 = arith.mulf %108, %93 : vector<8x32xf32>
    %110 = vector.extract_strided_slice %105 {offsets = [0, 0], sizes = [8, 32], strides = [1, 1]} : vector<8x96xf32> to vector<8x32xf32>
    %111 = arith.mulf %110, %107 : vector<8x32xf32>
    %112 = arith.addf %109, %111 : vector<8x32xf32>
    %113 = vector.extract_strided_slice %105 {offsets = [0, 64], sizes = [8, 32], strides = [1, 1]} : vector<8x96xf32> to vector<8x32xf32>
    %114 = math.tanh %112 : vector<8x32xf32>
    %115 = arith.mulf %113, %114 : vector<8x32xf32>
    %116 = vector.extract_strided_slice %8 {offsets = [40, 0], sizes = [8, 128], strides = [1, 1]} : vector<72x128xf32> to vector<8x128xf32>
    %cst_21 = arith.constant dense<0.000000e+00> : vector<8x128xf32>
    %117 = tpu.matmul %115, %9, %cst_21 {dimension_numbers = #tpu.dot_dimension_numbers<[1], [0], [0], [1], [0, 0, 1, 1], [], []>} : vector<8x32xf32>, vector<32x128xf32>, vector<8x128xf32> -> vector<8x128xf32>
    %118 = arith.addf %116, %117 : vector<8x128xf32>
    %119 = vector.extract_strided_slice %118 {offsets = [0, 0], sizes = [8, 96], strides = [1, 1]} : vector<8x128xf32> to vector<8x96xf32>
    %120 = arith.negf %119 : vector<8x96xf32>
    %121 = math.exp %120 : vector<8x96xf32>
    %cst_22 = arith.constant 1.000000e+00 : f32
    %122 = vector.broadcast %cst_22 : f32 to vector<8x96xf32>
    %123 = arith.addf %122, %121 : vector<8x96xf32>
    %124 = arith.divf %122, %123 : vector<8x96xf32>
    %125 = vector.extract_strided_slice %118 {offsets = [0, 96], sizes = [8, 32], strides = [1, 1]} : vector<8x128xf32> to vector<8x32xf32>
    %126 = math.tanh %125 : vector<8x32xf32>
    %127 = vector.extract_strided_slice %124 {offsets = [0, 32], sizes = [8, 32], strides = [1, 1]} : vector<8x96xf32> to vector<8x32xf32>
    %128 = arith.mulf %127, %112 : vector<8x32xf32>
    %129 = vector.extract_strided_slice %124 {offsets = [0, 0], sizes = [8, 32], strides = [1, 1]} : vector<8x96xf32> to vector<8x32xf32>
    %130 = arith.mulf %129, %126 : vector<8x32xf32>
    %131 = arith.addf %128, %130 : vector<8x32xf32>
    %132 = vector.extract_strided_slice %124 {offsets = [0, 64], sizes = [8, 32], strides = [1, 1]} : vector<8x96xf32> to vector<8x32xf32>
    %133 = math.tanh %131 : vector<8x32xf32>
    %134 = arith.mulf %132, %133 : vector<8x32xf32>
    %135 = vector.extract_strided_slice %8 {offsets = [48, 0], sizes = [8, 128], strides = [1, 1]} : vector<72x128xf32> to vector<8x128xf32>
    %cst_23 = arith.constant dense<0.000000e+00> : vector<8x128xf32>
    %136 = tpu.matmul %134, %9, %cst_23 {dimension_numbers = #tpu.dot_dimension_numbers<[1], [0], [0], [1], [0, 0, 1, 1], [], []>} : vector<8x32xf32>, vector<32x128xf32>, vector<8x128xf32> -> vector<8x128xf32>
    %137 = arith.addf %135, %136 : vector<8x128xf32>
    %138 = vector.extract_strided_slice %137 {offsets = [0, 0], sizes = [8, 96], strides = [1, 1]} : vector<8x128xf32> to vector<8x96xf32>
    %139 = arith.negf %138 : vector<8x96xf32>
    %140 = math.exp %139 : vector<8x96xf32>
    %cst_24 = arith.constant 1.000000e+00 : f32
    %141 = vector.broadcast %cst_24 : f32 to vector<8x96xf32>
    %142 = arith.addf %141, %140 : vector<8x96xf32>
    %143 = arith.divf %141, %142 : vector<8x96xf32>
    %144 = vector.extract_strided_slice %137 {offsets = [0, 96], sizes = [8, 32], strides = [1, 1]} : vector<8x128xf32> to vector<8x32xf32>
    %145 = math.tanh %144 : vector<8x32xf32>
    %146 = vector.extract_strided_slice %143 {offsets = [0, 32], sizes = [8, 32], strides = [1, 1]} : vector<8x96xf32> to vector<8x32xf32>
    %147 = arith.mulf %146, %131 : vector<8x32xf32>
    %148 = vector.extract_strided_slice %143 {offsets = [0, 0], sizes = [8, 32], strides = [1, 1]} : vector<8x96xf32> to vector<8x32xf32>
    %149 = arith.mulf %148, %145 : vector<8x32xf32>
    %150 = arith.addf %147, %149 : vector<8x32xf32>
    %151 = vector.extract_strided_slice %143 {offsets = [0, 64], sizes = [8, 32], strides = [1, 1]} : vector<8x96xf32> to vector<8x32xf32>
    %152 = math.tanh %150 : vector<8x32xf32>
    %153 = arith.mulf %151, %152 : vector<8x32xf32>
    %154 = vector.extract_strided_slice %8 {offsets = [56, 0], sizes = [8, 128], strides = [1, 1]} : vector<72x128xf32> to vector<8x128xf32>
    %cst_25 = arith.constant dense<0.000000e+00> : vector<8x128xf32>
    %155 = tpu.matmul %153, %9, %cst_25 {dimension_numbers = #tpu.dot_dimension_numbers<[1], [0], [0], [1], [0, 0, 1, 1], [], []>} : vector<8x32xf32>, vector<32x128xf32>, vector<8x128xf32> -> vector<8x128xf32>
    %156 = arith.addf %154, %155 : vector<8x128xf32>
    %157 = vector.extract_strided_slice %156 {offsets = [0, 0], sizes = [8, 96], strides = [1, 1]} : vector<8x128xf32> to vector<8x96xf32>
    %158 = arith.negf %157 : vector<8x96xf32>
    %159 = math.exp %158 : vector<8x96xf32>
    %cst_26 = arith.constant 1.000000e+00 : f32
    %160 = vector.broadcast %cst_26 : f32 to vector<8x96xf32>
    %161 = arith.addf %160, %159 : vector<8x96xf32>
    %162 = arith.divf %160, %161 : vector<8x96xf32>
    %163 = vector.extract_strided_slice %156 {offsets = [0, 96], sizes = [8, 32], strides = [1, 1]} : vector<8x128xf32> to vector<8x32xf32>
    %164 = math.tanh %163 : vector<8x32xf32>
    %165 = vector.extract_strided_slice %162 {offsets = [0, 32], sizes = [8, 32], strides = [1, 1]} : vector<8x96xf32> to vector<8x32xf32>
    %166 = arith.mulf %165, %150 : vector<8x32xf32>
    %167 = vector.extract_strided_slice %162 {offsets = [0, 0], sizes = [8, 32], strides = [1, 1]} : vector<8x96xf32> to vector<8x32xf32>
    %168 = arith.mulf %167, %164 : vector<8x32xf32>
    %169 = arith.addf %166, %168 : vector<8x32xf32>
    %170 = vector.extract_strided_slice %162 {offsets = [0, 64], sizes = [8, 32], strides = [1, 1]} : vector<8x96xf32> to vector<8x32xf32>
    %171 = math.tanh %169 : vector<8x32xf32>
    %172 = arith.mulf %170, %171 : vector<8x32xf32>
    %173 = vector.extract_strided_slice %8 {offsets = [64, 0], sizes = [8, 128], strides = [1, 1]} : vector<72x128xf32> to vector<8x128xf32>
    %cst_27 = arith.constant dense<0.000000e+00> : vector<8x128xf32>
    %174 = tpu.matmul %172, %9, %cst_27 {dimension_numbers = #tpu.dot_dimension_numbers<[1], [0], [0], [1], [0, 0, 1, 1], [], []>} : vector<8x32xf32>, vector<32x128xf32>, vector<8x128xf32> -> vector<8x128xf32>
    %175 = arith.addf %173, %174 : vector<8x128xf32>
    %176 = vector.extract_strided_slice %175 {offsets = [0, 0], sizes = [8, 96], strides = [1, 1]} : vector<8x128xf32> to vector<8x96xf32>
    %177 = arith.negf %176 : vector<8x96xf32>
    %178 = math.exp %177 : vector<8x96xf32>
    %cst_28 = arith.constant 1.000000e+00 : f32
    %179 = vector.broadcast %cst_28 : f32 to vector<8x96xf32>
    %180 = arith.addf %179, %178 : vector<8x96xf32>
    %181 = arith.divf %179, %180 : vector<8x96xf32>
    %182 = vector.extract_strided_slice %175 {offsets = [0, 96], sizes = [8, 32], strides = [1, 1]} : vector<8x128xf32> to vector<8x32xf32>
    %183 = math.tanh %182 : vector<8x32xf32>
    %184 = vector.extract_strided_slice %181 {offsets = [0, 32], sizes = [8, 32], strides = [1, 1]} : vector<8x96xf32> to vector<8x32xf32>
    %185 = arith.mulf %184, %169 : vector<8x32xf32>
    %186 = vector.extract_strided_slice %181 {offsets = [0, 0], sizes = [8, 32], strides = [1, 1]} : vector<8x96xf32> to vector<8x32xf32>
    %187 = arith.mulf %186, %183 : vector<8x32xf32>
    %188 = arith.addf %185, %187 : vector<8x32xf32>
    %189 = vector.extract_strided_slice %181 {offsets = [0, 64], sizes = [8, 32], strides = [1, 1]} : vector<8x96xf32> to vector<8x32xf32>
    %190 = math.tanh %188 : vector<8x32xf32>
    %191 = arith.mulf %189, %190 : vector<8x32xf32>
    %192 = vector.extract_strided_slice %191 {offsets = [0, 16], sizes = [8, 16], strides = [1, 1]} : vector<8x32xf32> to vector<8x16xf32>
    %c0_29 = arith.constant 0 : index
    %c0_30 = arith.constant 0 : index
    %193 = vector.load %arg5[%c0_29, %c0_30] : memref<16x32xf32, #tpu.memory_space<vmem>>, vector<16x32xf32>
    %cst_31 = arith.constant dense<0.000000e+00> : vector<8x32xf32>
    %194 = tpu.matmul %192, %193, %cst_31 {dimension_numbers = #tpu.dot_dimension_numbers<[1], [0], [0], [1], [0, 0, 1, 1], [], []>} : vector<8x16xf32>, vector<16x32xf32>, vector<8x32xf32> -> vector<8x32xf32>
    %c0_32 = arith.constant 0 : index
    %c0_33 = arith.constant 0 : index
    %195 = vector.load %arg6[%c0_32, %c0_33] : memref<1x32xf32, #tpu.memory_space<vmem>>, vector<1x32xf32>
    %196 = vector.broadcast %195 : vector<1x32xf32> to vector<8x32xf32>
    %197 = arith.addf %194, %196 : vector<8x32xf32>
    %cst_34 = arith.constant 0.000000e+00 : f32
    %198 = vector.broadcast %cst_34 : f32 to vector<8x32xf32>
    %199 = arith.maximumf %197, %198 : vector<8x32xf32>
    %c0_35 = arith.constant 0 : index
    %c0_36 = arith.constant 0 : index
    %200 = vector.load %arg7[%c0_35, %c0_36] : memref<32x1xf32, #tpu.memory_space<vmem>>, vector<32x1xf32>
    %cst_37 = arith.constant dense<0.000000e+00> : vector<8x1xf32>
    %201 = tpu.matmul %199, %200, %cst_37 {dimension_numbers = #tpu.dot_dimension_numbers<[1], [0], [0], [1], [0, 0, 1, 1], [], []>} : vector<8x32xf32>, vector<32x1xf32>, vector<8x1xf32> -> vector<8x1xf32>
    %c0_38 = arith.constant 0 : index
    %c0_39 = arith.constant 0 : index
    %202 = vector.load %arg8[%c0_38, %c0_39] : memref<1x1xf32, #tpu.memory_space<vmem>>, vector<1x1xf32>
    %203 = vector.broadcast %202 : vector<1x1xf32> to vector<8x1xf32>
    %204 = arith.addf %201, %203 : vector<8x1xf32>
    %c0_40 = arith.constant 0 : index
    %c0_41 = arith.constant 0 : index
    %205 = vector.load %arg9[%c0_40, %c0_41] : memref<8x1xf32, #tpu.memory_space<vmem>>, vector<8x1xf32>
    tpu.vector_store %arg9[%c0_40, %c0_41], %204 {strides = array<i32>} : memref<8x1xf32, #tpu.memory_space<vmem>>, vector<8x1xf32>,
    return
  }
}

</mosaic_0001>

<llo_original>
// kernel: forward.1
$region0: #{forward.1}
  #allocation0 [shape = 'u32[]', space=smem, size = 0x4, offset = 0x4, fixed_abs, tag = 'smem constant byte address 0x4 - core index']
  #allocation1 [shape = 'u32[144,128]{1,0:T(1,128)}', space=vmem, size = 0x12000, scoped, tag = 'internal scratch']
  #allocation2 [shape = 'f32[1,1]{1,0:T(1,128)S(1)}', space=vmem, size = 0x200, scoped, tag = 'scoped memory for forward.1']
  %s0 = inlined_call_operand.vmem [shape: f32[72,8], index: 0, kind: input, shape index: {}]
  %s1 = inlined_call_operand.vmem [shape: f32[1,8], index: 1, kind: input, shape index: {}]
  %s2 = inlined_call_operand.vmem [shape: f32[8,128], index: 2, kind: input, shape index: {}]
  %s3 = inlined_call_operand.vmem [shape: f32[1,128], index: 3, kind: input, shape index: {}]
  %s4 = inlined_call_operand.vmem [shape: f32[32,128], index: 4, kind: input, shape index: {}]
  %s5 = inlined_call_operand.vmem [shape: f32[16,32], index: 5, kind: input, shape index: {}]
  %s6 = inlined_call_operand.vmem [shape: f32[1,32], index: 6, kind: input, shape index: {}]
  %s7 = inlined_call_operand.vmem [shape: f32[32,1], index: 7, kind: input, shape index: {}]
  %s8 = inlined_call_operand.<no memory space> [shape: f32[1,1], index: 8, kind: input, shape index: {}]
  %s9 = inlined_call_operand.vmem [shape: f32[8,1], index: 9, kind: output, shape index: {}]
  %s10 = sld [smem:[#allocation0]]
  $region46: #{forward.1} parent=0
    _
  %s12 = ssub.s32 1, %s10
  %s13 = scalar_select 0, %s12, %s10
  %v14 = vstv %s8
  %15 = vst [vmem:[#allocation2] sm:$0x1] %v14
  // Predicated region
  $region2: #{forward.1} parent=0 // pred_check
    _
  $region3: #{forward.1} parent=0 // pred_check_branch
    %17 = sbr.rel (0) target = $region5
  $region4: #{forward.1} parent=0 // pred_region
    _
  $region5: #{forward.1} parent=0 // pred_fallthru
    _
  // Predicated region
  $region6: #{forward.1} parent=0 // pred_check
    _
  $region7: #{forward.1} parent=0 // pred_check_branch
    %19 = sbr.rel (0) target = $region9
  $region8: #{forward.1} parent=0 // pred_region
    _
  $region9: #{forward.1} parent=0 // pred_fallthru
    _
  // Predicated region
  $region10: #{forward.1} parent=0 // pred_check
    _
  $region11: #{forward.1} parent=0 // pred_check_branch
    %21 = sbr.rel (0) target = $region13
  $region12: #{forward.1} parent=0 // pred_region
    _
  $region13: #{forward.1} parent=0 // pred_fallthru
    _
  // Predicated region
  $region14: #{forward.1} parent=0 // pred_check
    _
  $region15: #{forward.1} parent=0 // pred_check_branch
    %23 = sbr.rel (0) target = $region17
  $region16: #{forward.1} parent=0 // pred_region
    _
  $region17: #{forward.1} parent=0 // pred_fallthru
    _
  // Predicated region
  $region18: #{forward.1} parent=0 // pred_check
    _
  $region19: #{forward.1} parent=0 // pred_check_branch
    %25 = sbr.rel (0) target = $region21
  $region20: #{forward.1} parent=0 // pred_region
    _
  $region21: #{forward.1} parent=0 // pred_fallthru
    _
  // Predicated region
  $region22: #{forward.1} parent=0 // pred_check
    _
  $region23: #{forward.1} parent=0 // pred_check_branch
    %27 = sbr.rel (0) target = $region25
  $region24: #{forward.1} parent=0 // pred_region
    _
  $region25: #{forward.1} parent=0 // pred_fallthru
    _
  // Predicated region
  $region26: #{forward.1} parent=0 // pred_check
    _
  $region27: #{forward.1} parent=0 // pred_check_branch
    %29 = sbr.rel (0) target = $region29
  $region28: #{forward.1} parent=0 // pred_region
    _
  $region29: #{forward.1} parent=0 // pred_fallthru
    _
  // Predicated region
  $region30: #{forward.1} parent=0 // pred_check
    _
  $region31: #{forward.1} parent=0 // pred_check_branch
    %31 = sbr.rel (0) target = $region33
  $region32: #{forward.1} parent=0 // pred_region
    _
  $region33: #{forward.1} parent=0 // pred_fallthru
    _
  // Predicated region
  $region34: #{forward.1} parent=0 // pred_check
    _
  $region35: #{forward.1} parent=0 // pred_check_branch
    %33 = sbr.rel (0) target = $region37
  $region36: #{forward.1} parent=0 // pred_region
    _
  $region37: #{forward.1} parent=0 // pred_fallthru
    _
  %v34 = vld [vmem:[%s0] sm:$0xff]
  %v35 = vld [vmem:[%s0 + $0x8] sm:$0xff]
  %v36 = vld [vmem:[%s0 + $0x10] sm:$0xff]
  %v37 = vld [vmem:[%s0 + $0x18] sm:$0xff]
  %v38 = vld [vmem:[%s0 + $0x20] sm:$0xff]
  %v39 = vld [vmem:[%s0 + $0x28] sm:$0xff]
  %v40 = vld [vmem:[%s0 + $0x30] sm:$0xff]
  %v41 = vld [vmem:[%s0 + $0x38] sm:$0xff]
  %v42 = vld [vmem:[%s0 + $0x40] sm:$0xff]
  %v43 = vld [vmem:[%s1] sm:$0x1]
  %v45 = vlaneseq
  %v46 = vshrl.u32 %v45, 7
  %v47 = vsub.s32 0, %v46
  %v48 = vrot.slane %v43, %v47
  %v50 = vmul.f32 %v34, %v48
  %v51 = vmul.f32 %v35, %v48
  %v52 = vmul.f32 %v36, %v48
  %v53 = vmul.f32 %v37, %v48
  %v54 = vmul.f32 %v38, %v48
  %v55 = vmul.f32 %v39, %v48
  %v56 = vmul.f32 %v40, %v48
  %v57 = vmul.f32 %v41, %v48
  %v58 = vmul.f32 %v42, %v48
  %v59 = vld [vmem:[%s2] sm:$0xff]
  %v60 = vld [vmem:[%s3] sm:$0x1]
  %v62 = vlaneseq
  %v63 = vshrl.u32 %v62, 7
  %v64 = vsub.s32 0, %v63
  %v65 = vrot.slane %v60, %v64
  %vm67 = vcmask 64512
  %v69 = vsel %vm67, %v50, 0
  %v72 = vsel %vm67, %v51, 0
  %v75 = vsel %vm67, %v52, 0
  %v78 = vsel %vm67, %v53, 0
  %v81 = vsel %vm67, %v54, 0
  %v84 = vsel %vm67, %v55, 0
  %v87 = vsel %vm67, %v56, 0
  %v90 = vsel %vm67, %v57, 0
  %v93 = vsel %vm67, %v58, 0
  %95 = vmatprep.subr.mxu0 0.0
  %96 = vmatpush1.msra.mxu0 0.0
  %97 = vmatprep.subr.mxu0 0.0
  %98 = vmatpush1.msra.mxu0 0.0
  %99 = vmatprep.subr.mxu0 0.0
  %100 = vmatpush1.msra.mxu0 0.0
  %101 = vmatprep.subr.mxu0 0.0
  %102 = vmatpush1.msra.mxu0 0.0
  %103 = vmatprep.subr.mxu0 0.0
  %104 = vmatpush1.msra.mxu0 0.0
  %105 = vmatprep.subr.mxu0 0.0
  %106 = vmatpush1.msra.mxu0 0.0
  %107 = vmatprep.subr.mxu0 0.0
  %108 = vmatpush1.msra.mxu0 0.0
  %109 = vmatprep.subr.mxu0 0.0
  %110 = vmatpush1.msra.mxu0 0.0
  %111 = vmatprep.subr.mxu0 0.0
  %112 = vmatpush1.msra.mxu0 0.0
  %113 = vmatprep.subr.mxu0 0.0
  %114 = vmatpush1.msra.mxu0 0.0
  %115 = vmatprep.subr.mxu0 0.0
  %116 = vmatpush1.msra.mxu0 0.0
  %117 = vmatprep.subr.mxu0 0.0
  %118 = vmatpush1.msra.mxu0 0.0
  %119 = vmatprep.subr.mxu0 0.0
  %120 = vmatpush1.msra.mxu0 0.0
  %121 = vmatprep.subr.mxu0 0.0
  %122 = vmatpush1.msra.mxu0 0.0
  %123 = vmatprep.subr.mxu0 0.0
  %124 = vmatpush1.msra.mxu0 0.0
  %125 = vmatprep.subr.mxu0 0.0
  %126 = vmatpush1.msra.mxu0 %v59
  %127 = vmatprep.subr.mxu0 0.0
  %128 = vmatpush2.msra.mxu0 0.0
  %129 = vmatprep.subr.mxu0 0.0
  %130 = vmatpush2.msra.mxu0 0.0
  %131 = vmatprep.subr.mxu0 0.0
  %132 = vmatpush2.msra.mxu0 0.0
  %133 = vmatprep.subr.mxu0 0.0
  %134 = vmatpush2.msra.mxu0 0.0
  %135 = vmatprep.subr.mxu0 0.0
  %136 = vmatpush2.msra.mxu0 0.0
  %137 = vmatprep.subr.mxu0 0.0
  %138 = vmatpush2.msra.mxu0 0.0
  %139 = vmatprep.subr.mxu0 0.0
  %140 = vmatpush2.msra.mxu0 0.0
  %141 = vmatprep.subr.mxu0 0.0
  %142 = vmatpush2.msra.mxu0 0.0
  %143 = vmatprep.subr.mxu0 0.0
  %144 = vmatpush2.msra.mxu0 0.0
  %145 = vmatprep.subr.mxu0 0.0
  %146 = vmatpush2.msra.mxu0 0.0
  %147 = vmatprep.subr.mxu0 0.0
  %148 = vmatpush2.msra.mxu0 0.0
  %149 = vmatprep.subr.mxu0 0.0
  %150 = vmatpush2.msra.mxu0 0.0
  %151 = vmatprep.subr.mxu0 0.0
  %152 = vmatpush2.msra.mxu0 0.0
  %153 = vmatprep.subr.mxu0 0.0
  %154 = vmatpush2.msra.mxu0 0.0
  %155 = vmatprep.subr.mxu0 0.0
  %156 = vmatpush2.msra.mxu0 0.0
  %157 = vmatprep.subr.mxu0 0.0
  %158 = vmatpush2.msra.mxu0 0.0
  %159 = vmatprep.mubr.f32.mxu0 0.0
  %160 = vmatmul.mubr.f32.gmra.mxu0 %v69
  %v161 = vpop.f32.mrf.mxu0
  %v162 = vadd.f32 %v65, %v161
  %v163 = vpop.f32.mrf.mxu0
  %164 = vmatprep.mubr.f32.mxu0 0.0
  %165 = vmatmul.mubr.f32.gmra.mxu0 %v72
  %v166 = vpop.f32.mrf.mxu0
  %v167 = vadd.f32 %v65, %v166
  %v168 = vpop.f32.mrf.mxu0
  %169 = vmatprep.mubr.f32.mxu0 0.0
  %170 = vmatmul.mubr.f32.gmra.mxu0 %v75
  %v171 = vpop.f32.mrf.mxu0
  %v172 = vadd.f32 %v65, %v171
  %v173 = vpop.f32.mrf.mxu0
  %174 = vmatprep.mubr.f32.mxu0 0.0
  %175 = vmatmul.mubr.f32.gmra.mxu0 %v78
  %v176 = vpop.f32.mrf.mxu0
  %v177 = vadd.f32 %v65, %v176
  %v178 = vpop.f32.mrf.mxu0
  %179 = vmatprep.mubr.f32.mxu0 0.0
  %180 = vmatmul.mubr.f32.gmra.mxu0 %v81
  %v181 = vpop.f32.mrf.mxu0
  %v182 = vadd.f32 %v65, %v181
  %v183 = vpop.f32.mrf.mxu0
  %184 = vmatprep.mubr.f32.mxu0 0.0
  %185 = vmatmul.mubr.f32.gmra.mxu0 %v84
  %v186 = vpop.f32.mrf.mxu0
  %v187 = vadd.f32 %v65, %v186
  %v188 = vpop.f32.mrf.mxu0
  %189 = vmatprep.mubr.f32.mxu0 0.0
  %190 = vmatmul.mubr.f32.gmra.mxu0 %v87
  %v191 = vpop.f32.mrf.mxu0
  %v192 = vadd.f32 %v65, %v191
  %v193 = vpop.f32.mrf.mxu0
  %194 = vmatprep.mubr.f32.mxu0 0.0
  %195 = vmatmul.mubr.f32.gmra.mxu0 %v90
  %v196 = vpop.f32.mrf.mxu0
  %v197 = vadd.f32 %v65, %v196
  %v198 = vpop.f32.mrf.mxu0
  %199 = vmatprep.mubr.f32.mxu0 0.0
  %200 = vmatmul.mubr.f32.gmra.mxu0 %v93
  %v201 = vpop.f32.mrf.mxu0
  %v202 = vadd.f32 %v65, %v201
  %v203 = vpop.f32.mrf.mxu0
  %204 = vdwg.mxu0
  %v205 = vld [vmem:[%s4] sm:$0xff]
  %v206 = vld [vmem:[%s4 + $0x8] sm:$0xff]
  %v207 = vld [vmem:[%s4 + $0x10] sm:$0xff]
  %v208 = vld [vmem:[%s4 + $0x18] sm:$0xff]
  %v209 = vlaneseq
  %v210 = vand.u32 %v209, 127
  %vm211 = vcmp.lt.s32.totalorder %v210, 16
  %v212 = vsel %vm211, 1, 0
  %v213 = vcvt.s32.f32 %v212
  %vm214 = vcmask 261120
  %v216 = vsel %vm214, 0.0, 0
  %218 = vmatprep.subr.mxu0 0.0
  %219 = vmatpush1.msra.mxu0 0.0
  %220 = vmatprep.subr.mxu0 0.0
  %221 = vmatpush1.msra.mxu0 0.0
  %222 = vmatprep.subr.mxu0 0.0
  %223 = vmatpush1.msra.mxu0 0.0
  %224 = vmatprep.subr.mxu0 0.0
  %225 = vmatpush1.msra.mxu0 0.0
  %226 = vmatprep.subr.mxu0 0.0
  %227 = vmatpush1.msra.mxu0 0.0
  %228 = vmatprep.subr.mxu0 0.0
  %229 = vmatpush1.msra.mxu0 0.0
  %230 = vmatprep.subr.mxu0 0.0
  %231 = vmatpush1.msra.mxu0 0.0
  %232 = vmatprep.subr.mxu0 0.0
  %233 = vmatpush1.msra.mxu0 0.0
  %234 = vmatprep.subr.mxu0 0.0
  %235 = vmatpush1.msra.mxu0 0.0
  %236 = vmatprep.subr.mxu0 0.0
  %237 = vmatpush1.msra.mxu0 0.0
  %238 = vmatprep.subr.mxu0 0.0
  %239 = vmatpush1.msra.mxu0 0.0
  %240 = vmatprep.subr.mxu0 0.0
  %241 = vmatpush1.msra.mxu0 0.0
  %242 = vmatprep.subr.mxu0 0.0
  %243 = vmatpush1.msra.mxu0 %v208
  %244 = vmatprep.subr.mxu0 0.0
  %245 = vmatpush1.msra.mxu0 %v207
  %246 = vmatprep.subr.mxu0 0.0
  %247 = vmatpush1.msra.mxu0 %v206
  %248 = vmatprep.subr.mxu0 0.0
  %249 = vmatpush1.msra.mxu0 %v205
  %250 = vmatprep.subr.mxu0 0.0
  %251 = vmatpush2.msra.mxu0 0.0
  %252 = vmatprep.subr.mxu0 0.0
  %253 = vmatpush2.msra.mxu0 0.0
  %254 = vmatprep.subr.mxu0 0.0
  %255 = vmatpush2.msra.mxu0 0.0
  %256 = vmatprep.subr.mxu0 0.0
  %257 = vmatpush2.msra.mxu0 0.0
  %258 = vmatprep.subr.mxu0 0.0
  %259 = vmatpush2.msra.mxu0 0.0
  %260 = vmatprep.subr.mxu0 0.0
  %261 = vmatpush2.msra.mxu0 0.0
  %262 = vmatprep.subr.mxu0 0.0
  %263 = vmatpush2.msra.mxu0 0.0
  %264 = vmatprep.subr.mxu0 0.0
  %265 = vmatpush2.msra.mxu0 0.0
  %266 = vmatprep.subr.mxu0 0.0
  %267 = vmatpush2.msra.mxu0 0.0
  %268 = vmatprep.subr.mxu0 0.0
  %269 = vmatpush2.msra.mxu0 0.0
  %270 = vmatprep.subr.mxu0 0.0
  %271 = vmatpush2.msra.mxu0 0.0
  %272 = vmatprep.subr.mxu0 0.0
  %273 = vmatpush2.msra.mxu0 0.0
  %274 = vmatprep.subr.mxu0 0.0
  %275 = vmatpush2.msra.mxu0 0.0
  %276 = vmatprep.subr.mxu0 0.0
  %277 = vmatpush2.msra.mxu0 0.0
  %278 = vmatprep.subr.mxu0 0.0
  %279 = vmatpush2.msra.mxu0 0.0
  %280 = vmatprep.subr.mxu0 0.0
  %281 = vmatpush2.msra.mxu0 0.0
  %282 = vmatprep.mubr.f32.mxu0 0.0
  %283 = vmatmul.mubr.f32.gmra.mxu0 %v216
  %v284 = vpop.f32.mrf.mxu0
  %v285 = vadd.f32 0.0, %v284
  %v286 = vpop.f32.mrf.mxu0
  %287 = vdwg.mxu0
  %v288 = vadd.f32 %v162, %v285
  %v289 = vxor.u32 %v288, 2147483648
  %v290 = vmul.f32 %v289, 1.442695
  %v291 = vpow.pop %v290
  %v292 = vadd.f32 %v291, 1.0
  %v293 = vrcp.pop %v292
  %v294 = vmul.f32 1.0, %v293
  %v295 = vtanh.pop %v288
  %v296 = vmul.f32 %v294, 0.0
  %298 = vrot.lane.b32.xlu0 %v295, 32
  %v299 = vpop.permute.xlu0 %298
  %v301 = vmul.f32 %v294, %v299
  %303 = vrot.lane.b32.xlu0 %v301, 32
  %v304 = vpop.permute.xlu0 %303
  %v306 = vadd.f32 %v296, %v304
  %v307 = vtanh.pop %v306
  %309 = vrot.lane.b32.xlu0 %v307, 32
  %v310 = vpop.permute.xlu0 %309
  %v312 = vmul.f32 %v294, %v310
  %314 = vrot.lane.b32.xlu0 %v213, 32
  %v315 = vpop.permute.xlu0 %314
  %v317 = vmul.f32 %v306, %v315
  %318 = vrot.lane.b32.xlu0 %v213, 64
  %v319 = vpop.permute.xlu0 %318
  %v321 = vmul.f32 %v312, %v319
  %323 = vrot.lane.b32.xlu0 %v321, 64
  %v324 = vpop.permute.xlu0 %323
  %v325 = vsel %vm214, %v324, 0
  %327 = vmatprep.subr.mxu0 0.0
  %328 = vmatpush1.msra.mxu0 0.0
  %329 = vmatprep.subr.mxu0 0.0
  %330 = vmatpush1.msra.mxu0 0.0
  %331 = vmatprep.subr.mxu0 0.0
  %332 = vmatpush1.msra.mxu0 0.0
  %333 = vmatprep.subr.mxu0 0.0
  %334 = vmatpush1.msra.mxu0 0.0
  %335 = vmatprep.subr.mxu0 0.0
  %336 = vmatpush1.msra.mxu0 0.0
  %337 = vmatprep.subr.mxu0 0.0
  %338 = vmatpush1.msra.mxu0 0.0
  %339 = vmatprep.subr.mxu0 0.0
  %340 = vmatpush1.msra.mxu0 0.0
  %341 = vmatprep.subr.mxu0 0.0
  %342 = vmatpush1.msra.mxu0 0.0
  %343 = vmatprep.subr.mxu0 0.0
  %344 = vmatpush1.msra.mxu0 0.0
  %345 = vmatprep.subr.mxu0 0.0
  %346 = vmatpush1.msra.mxu0 0.0
  %347 = vmatprep.subr.mxu0 0.0
  %348 = vmatpush1.msra.mxu0 0.0
  %349 = vmatprep.subr.mxu0 0.0
  %350 = vmatpush1.msra.mxu0 0.0
  %351 = vmatprep.subr.mxu0 0.0
  %352 = vmatpush1.msra.mxu0 %v208
  %353 = vmatprep.subr.mxu0 0.0
  %354 = vmatpush1.msra.mxu0 %v207
  %355 = vmatprep.subr.mxu0 0.0
  %356 = vmatpush1.msra.mxu0 %v206
  %357 = vmatprep.subr.mxu0 0.0
  %358 = vmatpush1.msra.mxu0 %v205
  %359 = vmatprep.subr.mxu0 0.0
  %360 = vmatpush2.msra.mxu0 0.0
  %361 = vmatprep.subr.mxu0 0.0
  %362 = vmatpush2.msra.mxu0 0.0
  %363 = vmatprep.subr.mxu0 0.0
  %364 = vmatpush2.msra.mxu0 0.0
  %365 = vmatprep.subr.mxu0 0.0
  %366 = vmatpush2.msra.mxu0 0.0
  %367 = vmatprep.subr.mxu0 0.0
  %368 = vmatpush2.msra.mxu0 0.0
  %369 = vmatprep.subr.mxu0 0.0
  %370 = vmatpush2.msra.mxu0 0.0
  %371 = vmatprep.subr.mxu0 0.0
  %372 = vmatpush2.msra.mxu0 0.0
  %373 = vmatprep.subr.mxu0 0.0
  %374 = vmatpush2.msra.mxu0 0.0
  %375 = vmatprep.subr.mxu0 0.0
  %376 = vmatpush2.msra.mxu0 0.0
  %377 = vmatprep.subr.mxu0 0.0
  %378 = vmatpush2.msra.mxu0 0.0
  %379 = vmatprep.subr.mxu0 0.0
  %380 = vmatpush2.msra.mxu0 0.0
  %381 = vmatprep.subr.mxu0 0.0
  %382 = vmatpush2.msra.mxu0 0.0
  %383 = vmatprep.subr.mxu0 0.0
  %384 = vmatpush2.msra.mxu0 0.0
  %385 = vmatprep.subr.mxu0 0.0
  %386 = vmatpush2.msra.mxu0 0.0
  %387 = vmatprep.subr.mxu0 0.0
  %388 = vmatpush2.msra.mxu0 0.0
  %389 = vmatprep.subr.mxu0 0.0
  %390 = vmatpush2.msra.mxu0 0.0
  %391 = vmatprep.mubr.f32.mxu0 0.0
  %392 = vmatmul.mubr.f32.gmra.mxu0 %v325
  %v393 = vpop.f32.mrf.mxu0
  %v394 = vadd.f32 0.0, %v393
  %v395 = vpop.f32.mrf.mxu0
  %396 = vdwg.mxu0
  %v397 = vadd.f32 %v167, %v394
  %v398 = vxor.u32 %v397, 2147483648
  %v399 = vmul.f32 %v398, 1.442695
  %v400 = vpow.pop %v399
  %v401 = vadd.f32 %v400, 1.0
  %v402 = vrcp.pop %v401
  %v403 = vmul.f32 1.0, %v402
  %v404 = vtanh.pop %v397
  %v405 = vmul.f32 %v403, %v317
  %407 = vrot.lane.b32.xlu0 %v404, 32
  %v408 = vpop.permute.xlu0 %407
  %v410 = vmul.f32 %v403, %v408
  %412 = vrot.lane.b32.xlu0 %v410, 32
  %v413 = vpop.permute.xlu0 %412
  %v415 = vadd.f32 %v405, %v413
  %v416 = vtanh.pop %v415
  %418 = vrot.lane.b32.xlu0 %v416, 32
  %v419 = vpop.permute.xlu0 %418
  %v421 = vmul.f32 %v403, %v419
  %423 = vrot.lane.b32.xlu0 %v421, 64
  %v424 = vpop.permute.xlu0 %423
  %v425 = vsel %vm214, %v424, 0
  %427 = vmatprep.subr.mxu0 0.0
  %428 = vmatpush1.msra.mxu0 0.0
  %429 = vmatprep.subr.mxu0 0.0
  %430 = vmatpush1.msra.mxu0 0.0
  %431 = vmatprep.subr.mxu0 0.0
  %432 = vmatpush1.msra.mxu0 0.0
  %433 = vmatprep.subr.mxu0 0.0
  %434 = vmatpush1.msra.mxu0 0.0
  %435 = vmatprep.subr.mxu0 0.0
  %436 = vmatpush1.msra.mxu0 0.0
  %437 = vmatprep.subr.mxu0 0.0
  %438 = vmatpush1.msra.mxu0 0.0
  %439 = vmatprep.subr.mxu0 0.0
  %440 = vmatpush1.msra.mxu0 0.0
  %441 = vmatprep.subr.mxu0 0.0
  %442 = vmatpush1.msra.mxu0 0.0
  %443 = vmatprep.subr.mxu0 0.0
  %444 = vmatpush1.msra.mxu0 0.0
  %445 = vmatprep.subr.mxu0 0.0
  %446 = vmatpush1.msra.mxu0 0.0
  %447 = vmatprep.subr.mxu0 0.0
  %448 = vmatpush1.msra.mxu0 0.0
  %449 = vmatprep.subr.mxu0 0.0
  %450 = vmatpush1.msra.mxu0 0.0
  %451 = vmatprep.subr.mxu0 0.0
  %452 = vmatpush1.msra.mxu0 %v208
  %453 = vmatprep.subr.mxu0 0.0
  %454 = vmatpush1.msra.mxu0 %v207
  %455 = vmatprep.subr.mxu0 0.0
  %456 = vmatpush1.msra.mxu0 %v206
  %457 = vmatprep.subr.mxu0 0.0
  %458 = vmatpush1.msra.mxu0 %v205
  %459 = vmatprep.subr.mxu0 0.0
  %460 = vmatpush2.msra.mxu0 0.0
  %461 = vmatprep.subr.mxu0 0.0
  %462 = vmatpush2.msra.mxu0 0.0
  %463 = vmatprep.subr.mxu0 0.0
  %464 = vmatpush2.msra.mxu0 0.0
  %465 = vmatprep.subr.mxu0 0.0
  %466 = vmatpush2.msra.mxu0 0.0
  %467 = vmatprep.subr.mxu0 0.0
  %468 = vmatpush2.msra.mxu0 0.0
  %469 = vmatprep.subr.mxu0 0.0
  %470 = vmatpush2.msra.mxu0 0.0
  %471 = vmatprep.subr.mxu0 0.0
  %472 = vmatpush2.msra.mxu0 0.0
  %473 = vmatprep.subr.mxu0 0.0
  %474 = vmatpush2.msra.mxu0 0.0
  %475 = vmatprep.subr.mxu0 0.0
  %476 = vmatpush2.msra.mxu0 0.0
  %477 = vmatprep.subr.mxu0 0.0
  %478 = vmatpush2.msra.mxu0 0.0
  %479 = vmatprep.subr.mxu0 0.0
  %480 = vmatpush2.msra.mxu0 0.0
  %481 = vmatprep.subr.mxu0 0.0
  %482 = vmatpush2.msra.mxu0 0.0
  %483 = vmatprep.subr.mxu0 0.0
  %484 = vmatpush2.msra.mxu0 0.0
  %485 = vmatprep.subr.mxu0 0.0
  %486 = vmatpush2.msra.mxu0 0.0
  %487 = vmatprep.subr.mxu0 0.0
  %488 = vmatpush2.msra.mxu0 0.0
  %489 = vmatprep.subr.mxu0 0.0
  %490 = vmatpush2.msra.mxu0 0.0
  %491 = vmatprep.mubr.f32.mxu0 0.0
  %492 = vmatmul.mubr.f32.gmra.mxu0 %v425
  %v493 = vpop.f32.mrf.mxu0
  %v494 = vadd.f32 0.0, %v493
  %v495 = vpop.f32.mrf.mxu0
  %496 = vdwg.mxu0
  %v497 = vadd.f32 %v172, %v494
  %v498 = vxor.u32 %v497, 2147483648
  %v499 = vmul.f32 %v498, 1.442695
  %v500 = vpow.pop %v499
  %v501 = vadd.f32 %v500, 1.0
  %v502 = vrcp.pop %v501
  %v503 = vmul.f32 1.0, %v502
  %v504 = vtanh.pop %v497
  %v505 = vmul.f32 %v503, %v415
  %507 = vrot.lane.b32.xlu0 %v504, 32
  %v508 = vpop.permute.xlu0 %507
  %v510 = vmul.f32 %v503, %v508
  %512 = vrot.lane.b32.xlu0 %v510, 32
  %v513 = vpop.permute.xlu0 %512
  %v515 = vadd.f32 %v505, %v513
  %v516 = vtanh.pop %v515
  %518 = vrot.lane.b32.xlu0 %v516, 32
  %v519 = vpop.permute.xlu0 %518
  %v521 = vmul.f32 %v503, %v519
  %523 = vrot.lane.b32.xlu0 %v521, 64
  %v524 = vpop.permute.xlu0 %523
  %v525 = vsel %vm214, %v524, 0
  %527 = vmatprep.subr.mxu0 0.0
  %528 = vmatpush1.msra.mxu0 0.0
  %529 = vmatprep.subr.mxu0 0.0
  %530 = vmatpush1.msra.mxu0 0.0
  %531 = vmatprep.subr.mxu0 0.0
  %532 = vmatpush1.msra.mxu0 0.0
  %533 = vmatprep.subr.mxu0 0.0
  %534 = vmatpush1.msra.mxu0 0.0
  %535 = vmatprep.subr.mxu0 0.0
  %536 = vmatpush1.msra.mxu0 0.0
  %537 = vmatprep.subr.mxu0 0.0
  %538 = vmatpush1.msra.mxu0 0.0
  %539 = vmatprep.subr.mxu0 0.0
  %540 = vmatpush1.msra.mxu0 0.0
  %541 = vmatprep.subr.mxu0 0.0
  %542 = vmatpush1.msra.mxu0 0.0
  %543 = vmatprep.subr.mxu0 0.0
  %544 = vmatpush1.msra.mxu0 0.0
  %545 = vmatprep.subr.mxu0 0.0
  %546 = vmatpush1.msra.mxu0 0.0
  %547 = vmatprep.subr.mxu0 0.0
  %548 = vmatpush1.msra.mxu0 0.0
  %549 = vmatprep.subr.mxu0 0.0
  %550 = vmatpush1.msra.mxu0 0.0
  %551 = vmatprep.subr.mxu0 0.0
  %552 = vmatpush1.msra.mxu0 %v208
  %553 = vmatprep.subr.mxu0 0.0
  %554 = vmatpush1.msra.mxu0 %v207
  %555 = vmatprep.subr.mxu0 0.0
  %556 = vmatpush1.msra.mxu0 %v206
  %557 = vmatprep.subr.mxu0 0.0
  %558 = vmatpush1.msra.mxu0 %v205
  %559 = vmatprep.subr.mxu0 0.0
  %560 = vmatpush2.msra.mxu0 0.0
  %561 = vmatprep.subr.mxu0 0.0
  %562 = vmatpush2.msra.mxu0 0.0
  %563 = vmatprep.subr.mxu0 0.0
  %564 = vmatpush2.msra.mxu0 0.0
  %565 = vmatprep.subr.mxu0 0.0
  %566 = vmatpush2.msra.mxu0 0.0
  %567 = vmatprep.subr.mxu0 0.0
  %568 = vmatpush2.msra.mxu0 0.0
  %569 = vmatprep.subr.mxu0 0.0
  %570 = vmatpush2.msra.mxu0 0.0
  %571 = vmatprep.subr.mxu0 0.0
  %572 = vmatpush2.msra.mxu0 0.0
  %573 = vmatprep.subr.mxu0 0.0
  %574 = vmatpush2.msra.mxu0 0.0
  %575 = vmatprep.subr.mxu0 0.0
  %576 = vmatpush2.msra.mxu0 0.0
  %577 = vmatprep.subr.mxu0 0.0
  %578 = vmatpush2.msra.mxu0 0.0
  %579 = vmatprep.subr.mxu0 0.0
  %580 = vmatpush2.msra.mxu0 0.0
  %581 = vmatprep.subr.mxu0 0.0
  %582 = vmatpush2.msra.mxu0 0.0
  %583 = vmatprep.subr.mxu0 0.0
  %584 = vmatpush2.msra.mxu0 0.0
  %585 = vmatprep.subr.mxu0 0.0
  %586 = vmatpush2.msra.mxu0 0.0
  %587 = vmatprep.subr.mxu0 0.0
  %588 = vmatpush2.msra.mxu0 0.0
  %589 = vmatprep.subr.mxu0 0.0
  %590 = vmatpush2.msra.mxu0 0.0
  %591 = vmatprep.mubr.f32.mxu0 0.0
  %592 = vmatmul.mubr.f32.gmra.mxu0 %v525
  %v593 = vpop.f32.mrf.mxu0
  %v594 = vadd.f32 0.0, %v593
  %v595 = vpop.f32.mrf.mxu0
  %596 = vdwg.mxu0
  %v597 = vadd.f32 %v177, %v594
  %v598 = vxor.u32 %v597, 2147483648
  %v599 = vmul.f32 %v598, 1.442695
  %v600 = vpow.pop %v599
  %v601 = vadd.f32 %v600, 1.0
  %v602 = vrcp.pop %v601
  %v603 = vmul.f32 1.0, %v602
  %v604 = vtanh.pop %v597
  %v605 = vmul.f32 %v603, %v515
  %607 = vrot.lane.b32.xlu0 %v604, 32
  %v608 = vpop.permute.xlu0 %607
  %v610 = vmul.f32 %v603, %v608
  %612 = vrot.lane.b32.xlu0 %v610, 32
  %v613 = vpop.permute.xlu0 %612
  %v615 = vadd.f32 %v605, %v613
  %v616 = vtanh.pop %v615
  %618 = vrot.lane.b32.xlu0 %v616, 32
  %v619 = vpop.permute.xlu0 %618
  %v621 = vmul.f32 %v603, %v619
  %623 = vrot.lane.b32.xlu0 %v621, 64
  %v624 = vpop.permute.xlu0 %623
  %v625 = vsel %vm214, %v624, 0
  %627 = vmatprep.subr.mxu0 0.0
  %628 = vmatpush1.msra.mxu0 0.0
  %629 = vmatprep.subr.mxu0 0.0
  %630 = vmatpush1.msra.mxu0 0.0
  %631 = vmatprep.subr.mxu0 0.0
  %632 = vmatpush1.msra.mxu0 0.0
  %633 = vmatprep.subr.mxu0 0.0
  %634 = vmatpush1.msra.mxu0 0.0
  %635 = vmatprep.subr.mxu0 0.0
  %636 = vmatpush1.msra.mxu0 0.0
  %637 = vmatprep.subr.mxu0 0.0
  %638 = vmatpush1.msra.mxu0 0.0
  %639 = vmatprep.subr.mxu0 0.0
  %640 = vmatpush1.msra.mxu0 0.0
  %641 = vmatprep.subr.mxu0 0.0
  %642 = vmatpush1.msra.mxu0 0.0
  %643 = vmatprep.subr.mxu0 0.0
  %644 = vmatpush1.msra.mxu0 0.0
  %645 = vmatprep.subr.mxu0 0.0
  %646 = vmatpush1.msra.mxu0 0.0
  %647 = vmatprep.subr.mxu0 0.0
  %648 = vmatpush1.msra.mxu0 0.0
  %649 = vmatprep.subr.mxu0 0.0
  %650 = vmatpush1.msra.mxu0 0.0
  %651 = vmatprep.subr.mxu0 0.0
  %652 = vmatpush1.msra.mxu0 %v208
  %653 = vmatprep.subr.mxu0 0.0
  %654 = vmatpush1.msra.mxu0 %v207
  %655 = vmatprep.subr.mxu0 0.0
  %656 = vmatpush1.msra.mxu0 %v206
  %657 = vmatprep.subr.mxu0 0.0
  %658 = vmatpush1.msra.mxu0 %v205
  %659 = vmatprep.subr.mxu0 0.0
  %660 = vmatpush2.msra.mxu0 0.0
  %661 = vmatprep.subr.mxu0 0.0
  %662 = vmatpush2.msra.mxu0 0.0
  %663 = vmatprep.subr.mxu0 0.0
  %664 = vmatpush2.msra.mxu0 0.0
  %665 = vmatprep.subr.mxu0 0.0
  %666 = vmatpush2.msra.mxu0 0.0
  %667 = vmatprep.subr.mxu0 0.0
  %668 = vmatpush2.msra.mxu0 0.0
  %669 = vmatprep.subr.mxu0 0.0
  %670 = vmatpush2.msra.mxu0 0.0
  %671 = vmatprep.subr.mxu0 0.0
  %672 = vmatpush2.msra.mxu0 0.0
  %673 = vmatprep.subr.mxu0 0.0
  %674 = vmatpush2.msra.mxu0 0.0
  %675 = vmatprep.subr.mxu0 0.0
  %676 = vmatpush2.msra.mxu0 0.0
  %677 = vmatprep.subr.mxu0 0.0
  %678 = vmatpush2.msra.mxu0 0.0
  %679 = vmatprep.subr.mxu0 0.0
  %680 = vmatpush2.msra.mxu0 0.0
  %681 = vmatprep.subr.mxu0 0.0
  %682 = vmatpush2.msra.mxu0 0.0
  %683 = vmatprep.subr.mxu0 0.0
  %684 = vmatpush2.msra.mxu0 0.0
  %685 = vmatprep.subr.mxu0 0.0
  %686 = vmatpush2.msra.mxu0 0.0
  %687 = vmatprep.subr.mxu0 0.0
  %688 = vmatpush2.msra.mxu0 0.0
  %689 = vmatprep.subr.mxu0 0.0
  %690 = vmatpush2.msra.mxu0 0.0
  %691 = vmatprep.mubr.f32.mxu0 0.0
  %692 = vmatmul.mubr.f32.gmra.mxu0 %v625
  %v693 = vpop.f32.mrf.mxu0
  %v694 = vadd.f32 0.0, %v693
  %v695 = vpop.f32.mrf.mxu0
  %696 = vdwg.mxu0
  %v697 = vadd.f32 %v182, %v694
  %v698 = vxor.u32 %v697, 2147483648
  %v699 = vmul.f32 %v698, 1.442695
  %v700 = vpow.pop %v699
  %v701 = vadd.f32 %v700, 1.0
  %v702 = vrcp.pop %v701
  %v703 = vmul.f32 1.0, %v702
  %v704 = vtanh.pop %v697
  %v705 = vmul.f32 %v703, %v615
  %707 = vrot.lane.b32.xlu0 %v704, 32
  %v708 = vpop.permute.xlu0 %707
  %v710 = vmul.f32 %v703, %v708
  %712 = vrot.lane.b32.xlu0 %v710, 32
  %v713 = vpop.permute.xlu0 %712
  %v715 = vadd.f32 %v705, %v713
  %v716 = vtanh.pop %v715
  %718 = vrot.lane.b32.xlu0 %v716, 32
  %v719 = vpop.permute.xlu0 %718
  %v721 = vmul.f32 %v703, %v719
  %723 = vrot.lane.b32.xlu0 %v721, 64
  %v724 = vpop.permute.xlu0 %723
  %v725 = vsel %vm214, %v724, 0
  %727 = vmatprep.subr.mxu0 0.0
  %728 = vmatpush1.msra.mxu0 0.0
  %729 = vmatprep.subr.mxu0 0.0
  %730 = vmatpush1.msra.mxu0 0.0
  %731 = vmatprep.subr.mxu0 0.0
  %732 = vmatpush1.msra.mxu0 0.0
  %733 = vmatprep.subr.mxu0 0.0
  %734 = vmatpush1.msra.mxu0 0.0
  %735 = vmatprep.subr.mxu0 0.0
  %736 = vmatpush1.msra.mxu0 0.0
  %737 = vmatprep.subr.mxu0 0.0
  %738 = vmatpush1.msra.mxu0 0.0
  %739 = vmatprep.subr.mxu0 0.0
  %740 = vmatpush1.msra.mxu0 0.0
  %741 = vmatprep.subr.mxu0 0.0
  %742 = vmatpush1.msra.mxu0 0.0
  %743 = vmatprep.subr.mxu0 0.0
  %744 = vmatpush1.msra.mxu0 0.0
  %745 = vmatprep.subr.mxu0 0.0
  %746 = vmatpush1.msra.mxu0 0.0
  %747 = vmatprep.subr.mxu0 0.0
  %748 = vmatpush1.msra.mxu0 0.0
  %749 = vmatprep.subr.mxu0 0.0
  %750 = vmatpush1.msra.mxu0 0.0
  %751 = vmatprep.subr.mxu0 0.0
  %752 = vmatpush1.msra.mxu0 %v208
  %753 = vmatprep.subr.mxu0 0.0
  %754 = vmatpush1.msra.mxu0 %v207
  %755 = vmatprep.subr.mxu0 0.0
  %756 = vmatpush1.msra.mxu0 %v206
  %757 = vmatprep.subr.mxu0 0.0
  %758 = vmatpush1.msra.mxu0 %v205
  %759 = vmatprep.subr.mxu0 0.0
  %760 = vmatpush2.msra.mxu0 0.0
  %761 = vmatprep.subr.mxu0 0.0
  %762 = vmatpush2.msra.mxu0 0.0
  %763 = vmatprep.subr.mxu0 0.0
  %764 = vmatpush2.msra.mxu0 0.0
  %765 = vmatprep.subr.mxu0 0.0
  %766 = vmatpush2.msra.mxu0 0.0
  %767 = vmatprep.subr.mxu0 0.0
  %768 = vmatpush2.msra.mxu0 0.0
  %769 = vmatprep.subr.mxu0 0.0
  %770 = vmatpush2.msra.mxu0 0.0
  %771 = vmatprep.subr.mxu0 0.0
  %772 = vmatpush2.msra.mxu0 0.0
  %773 = vmatprep.subr.mxu0 0.0
  %774 = vmatpush2.msra.mxu0 0.0
  %775 = vmatprep.subr.mxu0 0.0
  %776 = vmatpush2.msra.mxu0 0.0
  %777 = vmatprep.subr.mxu0 0.0
  %778 = vmatpush2.msra.mxu0 0.0
  %779 = vmatprep.subr.mxu0 0.0
  %780 = vmatpush2.msra.mxu0 0.0
  %781 = vmatprep.subr.mxu0 0.0
  %782 = vmatpush2.msra.mxu0 0.0
  %783 = vmatprep.subr.mxu0 0.0
  %784 = vmatpush2.msra.mxu0 0.0
  %785 = vmatprep.subr.mxu0 0.0
  %786 = vmatpush2.msra.mxu0 0.0
  %787 = vmatprep.subr.mxu0 0.0
  %788 = vmatpush2.msra.mxu0 0.0
  %789 = vmatprep.subr.mxu0 0.0
  %790 = vmatpush2.msra.mxu0 0.0
  %791 = vmatprep.mubr.f32.mxu0 0.0
  %792 = vmatmul.mubr.f32.gmra.mxu0 %v725
  %v793 = vpop.f32.mrf.mxu0
  %v794 = vadd.f32 0.0, %v793
  %v795 = vpop.f32.mrf.mxu0
  %796 = vdwg.mxu0
  %v797 = vadd.f32 %v187, %v794
  %v798 = vxor.u32 %v797, 2147483648
  %v799 = vmul.f32 %v798, 1.442695
  %v800 = vpow.pop %v799
  %v801 = vadd.f32 %v800, 1.0
  %v802 = vrcp.pop %v801
  %v803 = vmul.f32 1.0, %v802
  %v804 = vtanh.pop %v797
  %v805 = vmul.f32 %v803, %v715
  %807 = vrot.lane.b32.xlu0 %v804, 32
  %v808 = vpop.permute.xlu0 %807
  %v810 = vmul.f32 %v803, %v808
  %812 = vrot.lane.b32.xlu0 %v810, 32
  %v813 = vpop.permute.xlu0 %812
  %v815 = vadd.f32 %v805, %v813
  %v816 = vtanh.pop %v815
  %818 = vrot.lane.b32.xlu0 %v816, 32
  %v819 = vpop.permute.xlu0 %818
  %v821 = vmul.f32 %v803, %v819
  %823 = vrot.lane.b32.xlu0 %v821, 64
  %v824 = vpop.permute.xlu0 %823
  %v825 = vsel %vm214, %v824, 0
  %827 = vmatprep.subr.mxu0 0.0
  %828 = vmatpush1.msra.mxu0 0.0
  %829 = vmatprep.subr.mxu0 0.0
  %830 = vmatpush1.msra.mxu0 0.0
  %831 = vmatprep.subr.mxu0 0.0
  %832 = vmatpush1.msra.mxu0 0.0
  %833 = vmatprep.subr.mxu0 0.0
  %834 = vmatpush1.msra.mxu0 0.0
  %835 = vmatprep.subr.mxu0 0.0
  %836 = vmatpush1.msra.mxu0 0.0
  %837 = vmatprep.subr.mxu0 0.0
  %838 = vmatpush1.msra.mxu0 0.0
  %839 = vmatprep.subr.mxu0 0.0
  %840 = vmatpush1.msra.mxu0 0.0
  %841 = vmatprep.subr.mxu0 0.0
  %842 = vmatpush1.msra.mxu0 0.0
  %843 = vmatprep.subr.mxu0 0.0
  %844 = vmatpush1.msra.mxu0 0.0
  %845 = vmatprep.subr.mxu0 0.0
  %846 = vmatpush1.msra.mxu0 0.0
  %847 = vmatprep.subr.mxu0 0.0
  %848 = vmatpush1.msra.mxu0 0.0
  %849 = vmatprep.subr.mxu0 0.0
  %850 = vmatpush1.msra.mxu0 0.0
  %851 = vmatprep.subr.mxu0 0.0
  %852 = vmatpush1.msra.mxu0 %v208
  %853 = vmatprep.subr.mxu0 0.0
  %854 = vmatpush1.msra.mxu0 %v207
  %855 = vmatprep.subr.mxu0 0.0
  %856 = vmatpush1.msra.mxu0 %v206
  %857 = vmatprep.subr.mxu0 0.0
  %858 = vmatpush1.msra.mxu0 %v205
  %859 = vmatprep.subr.mxu0 0.0
  %860 = vmatpush2.msra.mxu0 0.0
  %861 = vmatprep.subr.mxu0 0.0
  %862 = vmatpush2.msra.mxu0 0.0
  %863 = vmatprep.subr.mxu0 0.0
  %864 = vmatpush2.msra.mxu0 0.0
  %865 = vmatprep.subr.mxu0 0.0
  %866 = vmatpush2.msra.mxu0 0.0
  %867 = vmatprep.subr.mxu0 0.0
  %868 = vmatpush2.msra.mxu0 0.0
  %869 = vmatprep.subr.mxu0 0.0
  %870 = vmatpush2.msra.mxu0 0.0
  %871 = vmatprep.subr.mxu0 0.0
  %872 = vmatpush2.msra.mxu0 0.0
  %873 = vmatprep.subr.mxu0 0.0
  %874 = vmatpush2.msra.mxu0 0.0
  %875 = vmatprep.subr.mxu0 0.0
  %876 = vmatpush2.msra.mxu0 0.0
  %877 = vmatprep.subr.mxu0 0.0
  %878 = vmatpush2.msra.mxu0 0.0
  %879 = vmatprep.subr.mxu0 0.0
  %880 = vmatpush2.msra.mxu0 0.0
  %881 = vmatprep.subr.mxu0 0.0
  %882 = vmatpush2.msra.mxu0 0.0
  %883 = vmatprep.subr.mxu0 0.0
  %884 = vmatpush2.msra.mxu0 0.0
  %885 = vmatprep.subr.mxu0 0.0
  %886 = vmatpush2.msra.mxu0 0.0
  %887 = vmatprep.subr.mxu0 0.0
  %888 = vmatpush2.msra.mxu0 0.0
  %889 = vmatprep.subr.mxu0 0.0
  %890 = vmatpush2.msra.mxu0 0.0
  %891 = vmatprep.mubr.f32.mxu0 0.0
  %892 = vmatmul.mubr.f32.gmra.mxu0 %v825
  %v893 = vpop.f32.mrf.mxu0
  %v894 = vadd.f32 0.0, %v893
  %v895 = vpop.f32.mrf.mxu0
  %896 = vdwg.mxu0
  %v897 = vadd.f32 %v192, %v894
  %v898 = vxor.u32 %v897, 2147483648
  %v899 = vmul.f32 %v898, 1.442695
  %v900 = vpow.pop %v899
  %v901 = vadd.f32 %v900, 1.0
  %v902 = vrcp.pop %v901
  %v903 = vmul.f32 1.0, %v902
  %v904 = vtanh.pop %v897
  %v905 = vmul.f32 %v903, %v815
  %907 = vrot.lane.b32.xlu0 %v904, 32
  %v908 = vpop.permute.xlu0 %907
  %v910 = vmul.f32 %v903, %v908
  %912 = vrot.lane.b32.xlu0 %v910, 32
  %v913 = vpop.permute.xlu0 %912
  %v915 = vadd.f32 %v905, %v913
  %v916 = vtanh.pop %v915
  %918 = vrot.lane.b32.xlu0 %v916, 32
  %v919 = vpop.permute.xlu0 %918
  %v921 = vmul.f32 %v903, %v919
  %923 = vrot.lane.b32.xlu0 %v921, 64
  %v924 = vpop.permute.xlu0 %923
  %v925 = vsel %vm214, %v924, 0
  %927 = vmatprep.subr.mxu0 0.0
  %928 = vmatpush1.msra.mxu0 0.0
  %929 = vmatprep.subr.mxu0 0.0
  %930 = vmatpush1.msra.mxu0 0.0
  %931 = vmatprep.subr.mxu0 0.0
  %932 = vmatpush1.msra.mxu0 0.0
  %933 = vmatprep.subr.mxu0 0.0
  %934 = vmatpush1.msra.mxu0 0.0
  %935 = vmatprep.subr.mxu0 0.0
  %936 = vmatpush1.msra.mxu0 0.0
  %937 = vmatprep.subr.mxu0 0.0
  %938 = vmatpush1.msra.mxu0 0.0
  %939 = vmatprep.subr.mxu0 0.0
  %940 = vmatpush1.msra.mxu0 0.0
  %941 = vmatprep.subr.mxu0 0.0
  %942 = vmatpush1.msra.mxu0 0.0
  %943 = vmatprep.subr.mxu0 0.0
  %944 = vmatpush1.msra.mxu0 0.0
  %945 = vmatprep.subr.mxu0 0.0
  %946 = vmatpush1.msra.mxu0 0.0
  %947 = vmatprep.subr.mxu0 0.0
  %948 = vmatpush1.msra.mxu0 0.0
  %949 = vmatprep.subr.mxu0 0.0
  %950 = vmatpush1.msra.mxu0 0.0
  %951 = vmatprep.subr.mxu0 0.0
  %952 = vmatpush1.msra.mxu0 %v208
  %953 = vmatprep.subr.mxu0 0.0
  %954 = vmatpush1.msra.mxu0 %v207
  %955 = vmatprep.subr.mxu0 0.0
  %956 = vmatpush1.msra.mxu0 %v206
  %957 = vmatprep.subr.mxu0 0.0
  %958 = vmatpush1.msra.mxu0 %v205
  %959 = vmatprep.subr.mxu0 0.0
  %960 = vmatpush2.msra.mxu0 0.0
  %961 = vmatprep.subr.mxu0 0.0
  %962 = vmatpush2.msra.mxu0 0.0
  %963 = vmatprep.subr.mxu0 0.0
  %964 = vmatpush2.msra.mxu0 0.0
  %965 = vmatprep.subr.mxu0 0.0
  %966 = vmatpush2.msra.mxu0 0.0
  %967 = vmatprep.subr.mxu0 0.0
  %968 = vmatpush2.msra.mxu0 0.0
  %969 = vmatprep.subr.mxu0 0.0
  %970 = vmatpush2.msra.mxu0 0.0
  %971 = vmatprep.subr.mxu0 0.0
  %972 = vmatpush2.msra.mxu0 0.0
  %973 = vmatprep.subr.mxu0 0.0
  %974 = vmatpush2.msra.mxu0 0.0
  %975 = vmatprep.subr.mxu0 0.0
  %976 = vmatpush2.msra.mxu0 0.0
  %977 = vmatprep.subr.mxu0 0.0
  %978 = vmatpush2.msra.mxu0 0.0
  %979 = vmatprep.subr.mxu0 0.0
  %980 = vmatpush2.msra.mxu0 0.0
  %981 = vmatprep.subr.mxu0 0.0
  %982 = vmatpush2.msra.mxu0 0.0
  %983 = vmatprep.subr.mxu0 0.0
  %984 = vmatpush2.msra.mxu0 0.0
  %985 = vmatprep.subr.mxu0 0.0
  %986 = vmatpush2.msra.mxu0 0.0
  %987 = vmatprep.subr.mxu0 0.0
  %988 = vmatpush2.msra.mxu0 0.0
  %989 = vmatprep.subr.mxu0 0.0
  %990 = vmatpush2.msra.mxu0 0.0
  %991 = vmatprep.mubr.f32.mxu0 0.0
  %992 = vmatmul.mubr.f32.gmra.mxu0 %v925
  %v993 = vpop.f32.mrf.mxu0
  %v994 = vadd.f32 0.0, %v993
  %v995 = vpop.f32.mrf.mxu0
  %996 = vdwg.mxu0
  %v997 = vadd.f32 %v197, %v994
  %v998 = vxor.u32 %v997, 2147483648
  %v999 = vmul.f32 %v998, 1.442695
  %v1000 = vpow.pop %v999
  %v1001 = vadd.f32 %v1000, 1.0
  %v1002 = vrcp.pop %v1001
  %v1003 = vmul.f32 1.0, %v1002
  %v1004 = vtanh.pop %v997
  %v1005 = vmul.f32 %v1003, %v915
  %1007 = vrot.lane.b32.xlu0 %v1004, 32
  %v1008 = vpop.permute.xlu0 %1007
  %v1010 = vmul.f32 %v1003, %v1008
  %1012 = vrot.lane.b32.xlu0 %v1010, 32
  %v1013 = vpop.permute.xlu0 %1012
  %v1015 = vadd.f32 %v1005, %v1013
  %v1016 = vtanh.pop %v1015
  %1018 = vrot.lane.b32.xlu0 %v1016, 32
  %v1019 = vpop.permute.xlu0 %1018
  %v1021 = vmul.f32 %v1003, %v1019
  %1023 = vrot.lane.b32.xlu0 %v1021, 64
  %v1024 = vpop.permute.xlu0 %1023
  %v1025 = vsel %vm214, %v1024, 0
  %1027 = vmatprep.subr.mxu0 0.0
  %1028 = vmatpush1.msra.mxu0 0.0
  %1029 = vmatprep.subr.mxu0 0.0
  %1030 = vmatpush1.msra.mxu0 0.0
  %1031 = vmatprep.subr.mxu0 0.0
  %1032 = vmatpush1.msra.mxu0 0.0
  %1033 = vmatprep.subr.mxu0 0.0
  %1034 = vmatpush1.msra.mxu0 0.0
  %1035 = vmatprep.subr.mxu0 0.0
  %1036 = vmatpush1.msra.mxu0 0.0
  %1037 = vmatprep.subr.mxu0 0.0
  %1038 = vmatpush1.msra.mxu0 0.0
  %1039 = vmatprep.subr.mxu0 0.0
  %1040 = vmatpush1.msra.mxu0 0.0
  %1041 = vmatprep.subr.mxu0 0.0
  %1042 = vmatpush1.msra.mxu0 0.0
  %1043 = vmatprep.subr.mxu0 0.0
  %1044 = vmatpush1.msra.mxu0 0.0
  %1045 = vmatprep.subr.mxu0 0.0
  %1046 = vmatpush1.msra.mxu0 0.0
  %1047 = vmatprep.subr.mxu0 0.0
  %1048 = vmatpush1.msra.mxu0 0.0
  %1049 = vmatprep.subr.mxu0 0.0
  %1050 = vmatpush1.msra.mxu0 0.0
  %1051 = vmatprep.subr.mxu0 0.0
  %1052 = vmatpush1.msra.mxu0 %v208
  %1053 = vmatprep.subr.mxu0 0.0
  %1054 = vmatpush1.msra.mxu0 %v207
  %1055 = vmatprep.subr.mxu0 0.0
  %1056 = vmatpush1.msra.mxu0 %v206
  %1057 = vmatprep.subr.mxu0 0.0
  %1058 = vmatpush1.msra.mxu0 %v205
  %1059 = vmatprep.subr.mxu0 0.0
  %1060 = vmatpush2.msra.mxu0 0.0
  %1061 = vmatprep.subr.mxu0 0.0
  %1062 = vmatpush2.msra.mxu0 0.0
  %1063 = vmatprep.subr.mxu0 0.0
  %1064 = vmatpush2.msra.mxu0 0.0
  %1065 = vmatprep.subr.mxu0 0.0
  %1066 = vmatpush2.msra.mxu0 0.0
  %1067 = vmatprep.subr.mxu0 0.0
  %1068 = vmatpush2.msra.mxu0 0.0
  %1069 = vmatprep.subr.mxu0 0.0
  %1070 = vmatpush2.msra.mxu0 0.0
  %1071 = vmatprep.subr.mxu0 0.0
  %1072 = vmatpush2.msra.mxu0 0.0
  %1073 = vmatprep.subr.mxu0 0.0
  %1074 = vmatpush2.msra.mxu0 0.0
  %1075 = vmatprep.subr.mxu0 0.0
  %1076 = vmatpush2.msra.mxu0 0.0
  %1077 = vmatprep.subr.mxu0 0.0
  %1078 = vmatpush2.msra.mxu0 0.0
  %1079 = vmatprep.subr.mxu0 0.0
  %1080 = vmatpush2.msra.mxu0 0.0
  %1081 = vmatprep.subr.mxu0 0.0
  %1082 = vmatpush2.msra.mxu0 0.0
  %1083 = vmatprep.subr.mxu0 0.0
  %1084 = vmatpush2.msra.mxu0 0.0
  %1085 = vmatprep.subr.mxu0 0.0
  %1086 = vmatpush2.msra.mxu0 0.0
  %1087 = vmatprep.subr.mxu0 0.0
  %1088 = vmatpush2.msra.mxu0 0.0
  %1089 = vmatprep.subr.mxu0 0.0
  %1090 = vmatpush2.msra.mxu0 0.0
  %1091 = vmatprep.mubr.f32.mxu0 0.0
  %1092 = vmatmul.mubr.f32.gmra.mxu0 %v1025
  %v1093 = vpop.f32.mrf.mxu0
  %v1094 = vadd.f32 0.0, %v1093
  %v1095 = vpop.f32.mrf.mxu0
  %1096 = vdwg.mxu0
  %v1097 = vadd.f32 %v202, %v1094
  %v1098 = vxor.u32 %v1097, 2147483648
  %v1099 = vmul.f32 %v1098, 1.442695
  %v1100 = vpow.pop %v1099
  %v1101 = vadd.f32 %v1100, 1.0
  %v1102 = vrcp.pop %v1101
  %v1103 = vmul.f32 1.0, %v1102
  %v1104 = vtanh.pop %v1097
  %v1105 = vmul.f32 %v1103, %v1015
  %1107 = vrot.lane.b32.xlu0 %v1104, 32
  %v1108 = vpop.permute.xlu0 %1107
  %v1110 = vmul.f32 %v1103, %v1108
  %1112 = vrot.lane.b32.xlu0 %v1110, 32
  %v1113 = vpop.permute.xlu0 %1112
  %v1115 = vadd.f32 %v1105, %v1113
  %v1116 = vtanh.pop %v1115
  %1118 = vrot.lane.b32.xlu0 %v1116, 32
  %v1119 = vpop.permute.xlu0 %1118
  %v1121 = vmul.f32 %v1103, %v1119
  %v1122 = vld [vmem:[%s5] sm:$0xff]
  %v1123 = vld [vmem:[%s5 + $0x8] sm:$0xff]
  %v1124 = vld [vmem:[%s6] sm:$0x1]
  %v1126 = vlaneseq
  %v1127 = vshrl.u32 %v1126, 7
  %v1128 = vsub.s32 0, %v1127
  %v1129 = vrot.slane %v1124, %v1128
  %1132 = vrot.lane.b32.xlu0 %v1121, 48
  %v1133 = vpop.permute.xlu0 %1132
  %vm1134 = vcmask 130048
  %v1135 = vsel %vm1134, %v1133, 0
  %1137 = vmatprep.subr.mxu0 0.0
  %1138 = vmatpush1.msra.mxu0 0.0
  %1139 = vmatprep.subr.mxu0 0.0
  %1140 = vmatpush1.msra.mxu0 0.0
  %1141 = vmatprep.subr.mxu0 0.0
  %1142 = vmatpush1.msra.mxu0 0.0
  %1143 = vmatprep.subr.mxu0 0.0
  %1144 = vmatpush1.msra.mxu0 0.0
  %1145 = vmatprep.subr.mxu0 0.0
  %1146 = vmatpush1.msra.mxu0 0.0
  %1147 = vmatprep.subr.mxu0 0.0
  %1148 = vmatpush1.msra.mxu0 0.0
  %1149 = vmatprep.subr.mxu0 0.0
  %1150 = vmatpush1.msra.mxu0 0.0
  %1151 = vmatprep.subr.mxu0 0.0
  %1152 = vmatpush1.msra.mxu0 0.0
  %1153 = vmatprep.subr.mxu0 0.0
  %1154 = vmatpush1.msra.mxu0 0.0
  %1155 = vmatprep.subr.mxu0 0.0
  %1156 = vmatpush1.msra.mxu0 0.0
  %1157 = vmatprep.subr.mxu0 0.0
  %1158 = vmatpush1.msra.mxu0 0.0
  %1159 = vmatprep.subr.mxu0 0.0
  %1160 = vmatpush1.msra.mxu0 0.0
  %1161 = vmatprep.subr.mxu0 0.0
  %1162 = vmatpush1.msra.mxu0 0.0
  %1163 = vmatprep.subr.mxu0 0.0
  %1164 = vmatpush1.msra.mxu0 0.0
  %1165 = vmatprep.subr.mxu0 0.0
  %1166 = vmatpush1.msra.mxu0 %v1123
  %1167 = vmatprep.subr.mxu0 0.0
  %1168 = vmatpush1.msra.mxu0 %v1122
  %1169 = vmatprep.subr.mxu0 0.0
  %1170 = vmatpush2.msra.mxu0 0.0
  %1171 = vmatprep.subr.mxu0 0.0
  %1172 = vmatpush2.msra.mxu0 0.0
  %1173 = vmatprep.subr.mxu0 0.0
  %1174 = vmatpush2.msra.mxu0 0.0
  %1175 = vmatprep.subr.mxu0 0.0
  %1176 = vmatpush2.msra.mxu0 0.0
  %1177 = vmatprep.subr.mxu0 0.0
  %1178 = vmatpush2.msra.mxu0 0.0
  %1179 = vmatprep.subr.mxu0 0.0
  %1180 = vmatpush2.msra.mxu0 0.0
  %1181 = vmatprep.subr.mxu0 0.0
  %1182 = vmatpush2.msra.mxu0 0.0
  %1183 = vmatprep.subr.mxu0 0.0
  %1184 = vmatpush2.msra.mxu0 0.0
  %1185 = vmatprep.subr.mxu0 0.0
  %1186 = vmatpush2.msra.mxu0 0.0
  %1187 = vmatprep.subr.mxu0 0.0
  %1188 = vmatpush2.msra.mxu0 0.0
  %1189 = vmatprep.subr.mxu0 0.0
  %1190 = vmatpush2.msra.mxu0 0.0
  %1191 = vmatprep.subr.mxu0 0.0
  %1192 = vmatpush2.msra.mxu0 0.0
  %1193 = vmatprep.subr.mxu0 0.0
  %1194 = vmatpush2.msra.mxu0 0.0
  %1195 = vmatprep.subr.mxu0 0.0
  %1196 = vmatpush2.msra.mxu0 0.0
  %1197 = vmatprep.subr.mxu0 0.0
  %1198 = vmatpush2.msra.mxu0 0.0
  %1199 = vmatprep.subr.mxu0 0.0
  %1200 = vmatpush2.msra.mxu0 0.0
  %1201 = vmatprep.mubr.f32.mxu0 0.0
  %1202 = vmatmul.mubr.f32.gmra.mxu0 %v1135
  %v1203 = vpop.f32.mrf.mxu0
  %v1204 = vadd.f32 %v1129, %v1203
  %v1205 = vpop.f32.mrf.mxu0
  %1206 = vdwg.mxu0
  %v1207 = vmax.f32 %v1204, 0.0
  %v1208 = vld [vmem:[%s7] sm:$0xff]
  %v1209 = vld [vmem:[%s7 + $0x8] sm:$0xff]
  %v1210 = vld [vmem:[%s7 + $0x10] sm:$0xff]
  %v1211 = vld [vmem:[%s7 + $0x18] sm:$0xff]
  %v1212 = vld [vmem:[#allocation2] sm:$0x1]
  %v1214 = vlaneseq
  %v1215 = vshrl.u32 %v1214, 7
  %v1216 = vsub.s32 0, %v1215
  %v1217 = vrot.slane %v1212, %v1216
  %v1220 = vsel %vm214, %v1207, 0
  %1222 = vmatprep.subr.mxu0 0.0
  %1223 = vmatpush1.msra.mxu0 0.0
  %1224 = vmatprep.subr.mxu0 0.0
  %1225 = vmatpush1.msra.mxu0 0.0
  %1226 = vmatprep.subr.mxu0 0.0
  %1227 = vmatpush1.msra.mxu0 0.0
  %1228 = vmatprep.subr.mxu0 0.0
  %1229 = vmatpush1.msra.mxu0 0.0
  %1230 = vmatprep.subr.mxu0 0.0
  %1231 = vmatpush1.msra.mxu0 0.0
  %1232 = vmatprep.subr.mxu0 0.0
  %1233 = vmatpush1.msra.mxu0 0.0
  %1234 = vmatprep.subr.mxu0 0.0
  %1235 = vmatpush1.msra.mxu0 0.0
  %1236 = vmatprep.subr.mxu0 0.0
  %1237 = vmatpush1.msra.mxu0 0.0
  %1238 = vmatprep.subr.mxu0 0.0
  %1239 = vmatpush1.msra.mxu0 0.0
  %1240 = vmatprep.subr.mxu0 0.0
  %1241 = vmatpush1.msra.mxu0 0.0
  %1242 = vmatprep.subr.mxu0 0.0
  %1243 = vmatpush1.msra.mxu0 0.0
  %1244 = vmatprep.subr.mxu0 0.0
  %1245 = vmatpush1.msra.mxu0 0.0
  %1246 = vmatprep.subr.mxu0 0.0
  %1247 = vmatpush1.msra.mxu0 %v1211
  %1248 = vmatprep.subr.mxu0 0.0
  %1249 = vmatpush1.msra.mxu0 %v1210
  %1250 = vmatprep.subr.mxu0 0.0
  %1251 = vmatpush1.msra.mxu0 %v1209
  %1252 = vmatprep.subr.mxu0 0.0
  %1253 = vmatpush1.msra.mxu0 %v1208
  %1254 = vmatprep.subr.mxu0 0.0
  %1255 = vmatpush2.msra.mxu0 0.0
  %1256 = vmatprep.subr.mxu0 0.0
  %1257 = vmatpush2.msra.mxu0 0.0
  %1258 = vmatprep.subr.mxu0 0.0
  %1259 = vmatpush2.msra.mxu0 0.0
  %1260 = vmatprep.subr.mxu0 0.0
  %1261 = vmatpush2.msra.mxu0 0.0
  %1262 = vmatprep.subr.mxu0 0.0
  %1263 = vmatpush2.msra.mxu0 0.0
  %1264 = vmatprep.subr.mxu0 0.0
  %1265 = vmatpush2.msra.mxu0 0.0
  %1266 = vmatprep.subr.mxu0 0.0
  %1267 = vmatpush2.msra.mxu0 0.0
  %1268 = vmatprep.subr.mxu0 0.0
  %1269 = vmatpush2.msra.mxu0 0.0
  %1270 = vmatprep.subr.mxu0 0.0
  %1271 = vmatpush2.msra.mxu0 0.0
  %1272 = vmatprep.subr.mxu0 0.0
  %1273 = vmatpush2.msra.mxu0 0.0
  %1274 = vmatprep.subr.mxu0 0.0
  %1275 = vmatpush2.msra.mxu0 0.0
  %1276 = vmatprep.subr.mxu0 0.0
  %1277 = vmatpush2.msra.mxu0 0.0
  %1278 = vmatprep.subr.mxu0 0.0
  %1279 = vmatpush2.msra.mxu0 0.0
  %1280 = vmatprep.subr.mxu0 0.0
  %1281 = vmatpush2.msra.mxu0 0.0
  %1282 = vmatprep.subr.mxu0 0.0
  %1283 = vmatpush2.msra.mxu0 0.0
  %1284 = vmatprep.subr.mxu0 0.0
  %1285 = vmatpush2.msra.mxu0 0.0
  %1286 = vmatprep.mubr.f32.mxu0 0.0
  %1287 = vmatmul.mubr.f32.gmra.mxu0 %v1220
  %v1288 = vpop.f32.mrf.mxu0
  %v1289 = vadd.f32 %v1217, %v1288
  %v1290 = vpop.f32.mrf.mxu0
  %1291 = vdwg.mxu0
  %vm1292 = vcmask 7168
  %1293 = vst.msk [vmem:[%s9] sm:$0xff] %vm1292, %v1289
  // Predicated region
  $region38: #{forward.1} parent=0 // pred_check
    _
  $region39: #{forward.1} parent=0 // pred_check_branch
    %1295 = sbr.rel (0) target = $region41
  $region40: #{forward.1} parent=0 // pred_region
    _
  $region41: #{forward.1} parent=0 // pred_fallthru
    _
  // Predicated region
  $region42: #{forward.1} parent=0 // pred_check
    _
  $region43: #{forward.1} parent=0 // pred_check_branch
    %1297 = sbr.rel (0) target = $region45
  $region44: #{forward.1} parent=0 // pred_region
    _
  $region45: #{forward.1} parent=0 // pred_fallthru
    _

</llo_original>
